<compile_context>
chip_gen: v6e
topology: v6e:2x2x1
jax: 0.10.0
libtpu: 0.0.40
codegen_flags: <defaults>
</compile_context>

<pallas_src>
import functools

import jax
import jax.numpy as jnp
import numpy as np
from jax.experimental import pallas as pl
from jax.experimental.pallas import tpu as pltpu

NUM_CORES = 2  # leading "parallel" grid axis; uses both TCs on v7x, near-zero cost elsewhere.


def _choose_tile_n(n_rows: int, n_cols_total: int) -> int:
    """Largest lane-dense row tile keeping 2 inputs x 2 pipeline buffers inside scoped VMEM."""
    lane_pad = ((max(n_cols_total, 1) + 127) // 128) * 128
    row_bytes = lane_pad * 4                      # f32 upper bound (bf16 inputs only shrink this)
    target_block_bytes = 4 * 1024 * 1024          # ~4 MiB/block -> ~18 MiB pipelined total
    tile = (target_block_bytes // row_bytes) // 8 * 8
    tile = max(8, min(tile, 4096))
    n_pad = ((n_rows + 7) // 8) * 8
    return min(tile, n_pad)


def _soft_ce_kernel(x_ref, t_ref, o_ref, acc_ref, *, tile_n, n_rows, n_cols, steps_per_core):
    j = pl.program_id(1)

    @pl.when(j == 0)
    def _init():
        acc_ref[...] = jnp.zeros_like(acc_ref)

    x = x_ref[...].astype(jnp.float32)             # (TILE_N, C)
    t = t_ref[...].astype(jnp.float32)[:, 2:]      # (TILE_N, C): in-kernel target[:, 2:] slice

    # Row max on the XLU, exp on the EUP.
    m = jnp.max(x, axis=-1, keepdims=True)         # (TILE_N, 1)
    s = x - m
    e = jnp.exp(s)

    # Lane reductions offloaded to the (otherwise idle) MXU; HIGHEST keeps full f32 accuracy.
    ones = jnp.ones((n_cols, 128), dtype=jnp.float32)

    def _rowsum(a):
        return jnp.dot(a, ones, precision=jax.lax.Precision.HIGHEST,
                       preferred_element_type=jnp.float32)[:, :1]   # (TILE_N, 1)

    sum_e = _rowsum(e)
    sum_ts = _rowsum(t * s)
    sum_t = _rowsum(t)

    # loss_row = lse - sum(t*s)/sum(t)  ==  -sum((t / sum t) * log_softmax(x))
    lse = jnp.log(sum_e)
    loss = lse - sum_ts / sum_t                    # exact divide: one per row

    # Mask rows that fall outside the real array (partial last block / phantom blocks).
    block_idx = pl.program_id(0) * steps_per_core + j
    row_ids = block_idx * tile_n + jax.lax.broadcasted_iota(jnp.int32, (tile_n, 1), 0)
    loss = jnp.where(row_ids < n_rows, loss, 0.0)

    acc_ref[...] += jnp.sum(loss)

    @pl.when(j == pl.num_programs(1) - 1)
    def _finalize():
        o_ref[0] = acc_ref[...]


def my_cross_entropy(input_, target, weight=None, reduction="mean", *, tile_n=None):
    """JAX/Pallas equivalent of MyCrossEntropy.forward (weight=None path)."""
    assert input_.ndim == 2, f"Expected 2 dimensions (got {input_.ndim})"
    n, c = input_.shape
    assert target.shape == (n, c + 2), (target.shape, input_.shape)
    # TODO(synk): PyTorch `weight is not None` branch multiplies the (N,) loss by a (1, W)
    #             tensor (shape-dependent broadcast); only the default weight=None path is here.
    assert weight is None
    assert reduction in ("mean", "sum")

    if tile_n is None:
        tile_n = _choose_tile_n(n, c + 2)
    assert tile_n % 8 == 0 and tile_n > 0

    total_blocks = pl.cdiv(n, tile_n)
    steps_per_core = pl.cdiv(total_blocks, NUM_CORES)
    last_block = total_blocks - 1

    def row_block(ci, j):
        # Clamp so phantom blocks (NUM_CORES * steps_per_core > total_blocks) never index past
        # the array; their rows are masked out inside the kernel via the unclamped row ids.
        return jnp.minimum(ci * steps_per_core + j, last_block)

    kernel = functools.partial(_soft_ce_kernel, tile_n=tile_n, n_rows=n, n_cols=c,
                               steps_per_core=steps_per_core)

    partials = pl.pallas_call(
        kernel,
        out_shape=jax.ShapeDtypeStruct((NUM_CORES, 1, 1), jnp.float32),
        grid_spec=pltpu.PrefetchScalarGridSpec(
            num_scalar_prefetch=0,
            grid=(NUM_CORES, steps_per_core),
            in_specs=[
                pl.BlockSpec((tile_n, c), lambda ci, j: (row_block(ci, j), 0)),
                # Full (N, C+2) target block; [:, 2:] slicing happens in VMEM inside the kernel.
                pl.BlockSpec((tile_n, c + 2), lambda ci, j: (row_block(ci, j), 0)),
            ],
            out_specs=pl.BlockSpec((1, 1, 1), lambda ci, j: (ci, 0, 0)),
            scratch_shapes=[pltpu.VMEM((1, 1), jnp.float32)],
        ),
        compiler_params=pltpu.CompilerParams(
            dimension_semantics=("parallel", "arbitrary"),
            vmem_limit_bytes=32 * 1024 * 1024,
        ),
    )(input_, target)

    total = jnp.sum(partials)          # tiny (2-element) reduction of per-core partial sums
    if reduction == "mean":
        return total / n
    return total


def _reference(input_, target):
    t = target[:, 2:].astype(jnp.float32)
    q = jax.nn.log_softmax(input_.astype(jnp.float32), axis=-1)
    p = t / jnp.sum(t, axis=1, keepdims=True)
    return jnp.mean(-jnp.sum(p * q, axis=-1))


if __name__ == "__main__":
    key = jax.random.PRNGKey(0)
    k1, k2, k3, k4 = jax.random.split(key, 4)

    # Small shapes consistent with the module: (N, C) logits, (N, C+2) positive soft targets.
    N, C = 8, 32
    logits = jax.random.normal(k1, (N, C), dtype=jnp.float32)
    target = jax.random.uniform(k2, (N, C + 2), dtype=jnp.float32, minval=0.1, maxval=1.0)

    out = jax.block_until_ready(my_cross_entropy(logits, target))
    ref = _reference(logits, target)
    assert np.allclose(np.asarray(out), np.asarray(ref), rtol=1e-5, atol=1e-5), (out, ref)

    # Exercise the tiled path: N not a multiple of the row tile, partial last block, and a
    # phantom (clamped + masked) block on the parallel core axis.
    N2, C2 = 20, 32
    logits2 = jax.random.normal(k3, (N2, C2), dtype=jnp.float32)
    target2 = jax.random.uniform(k4, (N2, C2 + 2), dtype=jnp.float32, minval=0.1, maxval=1.0)
    out2 = jax.block_until_ready(my_cross_entropy(logits2, target2, tile_n=8))
    ref2 = _reference(logits2, target2)
    assert np.allclose(np.asarray(out2), np.asarray(ref2), rtol=1e-5, atol=1e-5), (out2, ref2)

    print("KERNEL_OK")
</pallas_src>

<mosaic_0001>
module attributes {stable_mosaic.version = 11 : i64} {
  func.func @_soft_ce_kernel(%arg0: i32, %arg1: i32, %arg2: memref<8x32xf32, #tpu.memory_space<vmem>>, %arg3: memref<8x34xf32, #tpu.memory_space<vmem>>, %arg4: memref<1x1x1xf32, #tpu.memory_space<vmem>>, %arg5: memref<1x1xf32, #tpu.memory_space<vmem>>) attributes {dimension_semantics = [#tpu.dimension_semantics<parallel>, #tpu.dimension_semantics<arbitrary>], iteration_bounds = array<i64: 2, 1>, scalar_prefetch = 0 : i64, scratch_operands = 1 : i64, tpu.core_type = #tpu.core_type<tc>, window_params = [{transform_indices = @transform_0, window_bounds = array<i64: 8, 32>}, {transform_indices = @transform_1, window_bounds = array<i64: 8, 34>}, {transform_indices = @transform_2, window_bounds = array<i64: 1, 1, 1>}]} {
    %c0_i32 = arith.constant 0 : i32
    %0 = arith.cmpi eq, %arg1, %c0_i32 : i32
    %1 = arith.extui %0 : i1 to i32
    %c0_i32_0 = arith.constant 0 : i32
    %2 = arith.cmpi ne, %1, %c0_i32_0 : i32
    scf.if %2 {
      %cst_17 = arith.constant 0.000000e+00 : f32
      %43 = vector.broadcast %cst_17 : f32 to vector<1x1xf32>
      %c0_18 = arith.constant 0 : index
      %c0_19 = arith.constant 0 : index
      %44 = vector.load %arg5[%c0_18, %c0_19] : memref<1x1xf32, #tpu.memory_space<vmem>>, vector<1x1xf32>
      tpu.vector_store %arg5[%c0_18, %c0_19], %43 {strides = array<i32>} : memref<1x1xf32, #tpu.memory_space<vmem>>, vector<1x1xf32>,
    } else {
    }
    %c0 = arith.constant 0 : index
    %c0_1 = arith.constant 0 : index
    %3 = vector.load %arg2[%c0, %c0_1] : memref<8x32xf32, #tpu.memory_space<vmem>>, vector<8x32xf32>
    %c0_2 = arith.constant 0 : index
    %c0_3 = arith.constant 0 : index
    %4 = vector.load %arg3[%c0_2, %c0_3] : memref<8x34xf32, #tpu.memory_space<vmem>>, vector<8x34xf32>
    %5 = vector.extract_strided_slice %4 {offsets = [0, 2], sizes = [8, 32], strides = [1, 1]} : vector<8x34xf32> to vector<8x32xf32>
    %cst = arith.constant dense<0xFF800000> : vector<8xf32>
    %6 = vector.multi_reduction <maximumf>, %3, %cst [1] : vector<8x32xf32> to vector<8xf32>
    %7 = vector.shape_cast %6 : vector<8xf32> to vector<8x1xf32>
    %8 = vector.broadcast %7 : vector<8x1xf32> to vector<8x32xf32>
    %9 = arith.subf %3, %8 : vector<8x32xf32>
    %10 = math.exp %9 : vector<8x32xf32>
    %cst_4 = arith.constant 1.000000e+00 : f32
    %11 = vector.broadcast %cst_4 : f32 to vector<32x128xf32>
    %cst_5 = arith.constant dense<0.000000e+00> : vector<8x128xf32>
    %12 = tpu.matmul %10, %11, %cst_5 {dimension_numbers = #tpu.dot_dimension_numbers<[1], [0], [0], [1], [0, 0, 1, 1], [], []>, precision = #tpu.contract_precision<fp32>} : vector<8x32xf32>, vector<32x128xf32>, vector<8x128xf32> -> vector<8x128xf32>
    %13 = vector.extract_strided_slice %12 {offsets = [0, 0], sizes = [8, 1], strides = [1, 1]} : vector<8x128xf32> to vector<8x1xf32>
    %14 = arith.mulf %5, %9 : vector<8x32xf32>
    %cst_6 = arith.constant dense<0.000000e+00> : vector<8x128xf32>
    %15 = tpu.matmul %14, %11, %cst_6 {dimension_numbers = #tpu.dot_dimension_numbers<[1], [0], [0], [1], [0, 0, 1, 1], [], []>, precision = #tpu.contract_precision<fp32>} : vector<8x32xf32>, vector<32x128xf32>, vector<8x128xf32> -> vector<8x128xf32>
    %16 = vector.extract_strided_slice %15 {offsets = [0, 0], sizes = [8, 1], strides = [1, 1]} : vector<8x128xf32> to vector<8x1xf32>
    %cst_7 = arith.constant dense<0.000000e+00> : vector<8x128xf32>
    %17 = tpu.matmul %5, %11, %cst_7 {dimension_numbers = #tpu.dot_dimension_numbers<[1], [0], [0], [1], [0, 0, 1, 1], [], []>, precision = #tpu.contract_precision<fp32>} : vector<8x32xf32>, vector<32x128xf32>, vector<8x128xf32> -> vector<8x128xf32>
    %18 = vector.extract_strided_slice %17 {offsets = [0, 0], sizes = [8, 1], strides = [1, 1]} : vector<8x128xf32> to vector<8x1xf32>
    %19 = math.log %13 : vector<8x1xf32>
    %20 = arith.divf %16, %18 : vector<8x1xf32>
    %21 = arith.subf %19, %20 : vector<8x1xf32>
    %c1_i32 = arith.constant 1 : i32
    %22 = arith.muli %arg0, %c1_i32 : i32
    %23 = arith.addi %22, %arg1 : i32
    %c8_i32 = arith.constant 8 : i32
    %24 = arith.muli %23, %c8_i32 : i32
    %25 = tpu.iota {dimensions = array<i32: 0>} : vector<8x1xi32>
    %26 = vector.broadcast %24 : i32 to vector<8x1xi32>
    %27 = arith.addi %26, %25 : vector<8x1xi32>
    %c8_i32_8 = arith.constant 8 : i32
    %28 = vector.broadcast %c8_i32_8 : i32 to vector<8x1xi32>
    %29 = arith.cmpi slt, %27, %28 : vector<8x1xi32>
    %cst_9 = arith.constant 0.000000e+00 : f32
    %30 = vector.broadcast %cst_9 : f32 to vector<8x1xf32>
    %31 = arith.select %29, %21, %30 : vector<8x1xi1>, vector<8x1xf32>
    %c0_10 = arith.constant 0 : index
    %c0_11 = arith.constant 0 : index
    %32 = vector.load %arg5[%c0_10, %c0_11] : memref<1x1xf32, #tpu.memory_space<vmem>>, vector<1x1xf32>
    %33 = vector.shape_cast %31 : vector<8x1xf32> to vector<1x8x1xf32>
    %cst_12 = arith.constant dense<0.000000e+00> : vector<1xf32>
    %34 = vector.multi_reduction <add>, %33, %cst_12 [1, 2] : vector<1x8x1xf32> to vector<1xf32>
    %35 = vector.shape_cast %34 : vector<1xf32> to vector<1x1x1xf32>
    %36 = vector.extract %35[0, 0, 0] : f32 from vector<1x1x1xf32>
    %37 = vector.broadcast %36 : f32 to vector<1x1xf32>
    %38 = arith.addf %32, %37 : vector<1x1xf32>
    %c0_13 = arith.constant 0 : index
    %c0_14 = arith.constant 0 : index
    %39 = vector.load %arg5[%c0_13, %c0_14] : memref<1x1xf32, #tpu.memory_space<vmem>>, vector<1x1xf32>
    tpu.vector_store %arg5[%c0_13, %c0_14], %38 {strides = array<i32>} : memref<1x1xf32, #tpu.memory_space<vmem>>, vector<1x1xf32>,
    %c0_i32_15 = arith.constant 0 : i32
    %40 = arith.cmpi eq, %arg1, %c0_i32_15 : i32
    %41 = arith.extui %40 : i1 to i32
    %c0_i32_16 = arith.constant 0 : i32
    %42 = arith.cmpi ne, %41, %c0_i32_16 : i32
    scf.if %42 {
      %c0_17 = arith.constant 0 : index
      %c0_18 = arith.constant 0 : index
      %43 = vector.load %arg5[%c0_17, %c0_18] : memref<1x1xf32, #tpu.memory_space<vmem>>, vector<1x1xf32>
      %c0_19 = arith.constant 0 : index
      %c0_20 = arith.constant 0 : index
      %c0_21 = arith.constant 0 : index
      %44 = vector.load %arg4[%c0_19, %c0_20, %c0_21] : memref<1x1x1xf32, #tpu.memory_space<vmem>>, vector<1x1x1xf32>
      %45 = vector.shape_cast %44 : vector<1x1x1xf32> to vector<1x1xf32>
      %46 = vector.shape_cast %43 : vector<1x1xf32> to vector<1x1x1xf32>
      tpu.vector_store %arg4[%c0_19, %c0_20, %c0_21], %46 {strides = array<i32>} : memref<1x1x1xf32, #tpu.memory_space<vmem>>, vector<1x1x1xf32>,
    } else {
    }
    return
  }
  func.func @transform_0(%arg0: i32, %arg1: i32) -> (i32, i32) {
    %c1_i32 = arith.constant 1 : i32
    %0 = arith.muli %arg0, %c1_i32 : i32
    %1 = arith.addi %0, %arg1 : i32
    %c0_i32 = arith.constant 0 : i32
    %2 = arith.minsi %1, %c0_i32 : i32
    %c0_i32_0 = arith.constant 0 : i32
    %c0_i32_1 = arith.constant 0 : i32
    return %2, %c0_i32_0 : i32, i32
  }
  func.func @transform_1(%arg0: i32, %arg1: i32) -> (i32, i32) {
    %c1_i32 = arith.constant 1 : i32
    %0 = arith.muli %arg0, %c1_i32 : i32
    %1 = arith.addi %0, %arg1 : i32
    %c0_i32 = arith.constant 0 : i32
    %2 = arith.minsi %1, %c0_i32 : i32
    %c0_i32_0 = arith.constant 0 : i32
    %c0_i32_1 = arith.constant 0 : i32
    return %2, %c0_i32_0 : i32, i32
  }
  func.func @transform_2(%arg0: i32, %arg1: i32) -> (i32, i32, i32) {
    %c0_i32 = arith.constant 0 : i32
    %c0_i32_0 = arith.constant 0 : i32
    %c0_i32_1 = arith.constant 0 : i32
    return %arg0, %c0_i32, %c0_i32_0 : i32, i32, i32
  }
}

</mosaic_0001>

<llo_original>
// kernel: tpu_custom_call.1
$region0: #{tpu_custom_call.1}
  #allocation0 [shape = 'u32[]', space=smem, size = 0x4, offset = 0x4, fixed_abs, tag = 'smem constant byte address 0x4 - core index']
  #allocation1 [shape = 'u32[144,128]{1,0:T(1,128)}', space=vmem, size = 0x12000, scoped, tag = 'internal scratch']
  #allocation2 [shape = 'f32[1,1]{1,0:T(1,128)}', space=vmem, size = 0x200, scoped, tag = 'scratch operand']
  %s0 = inlined_call_operand.hbm [shape: f32[8,32], index: 0, kind: input, shape index: {}]
  %s1 = inlined_call_operand.hbm [shape: f32[8,34], index: 1, kind: input, shape index: {}]
  %s2 = inlined_call_operand.vmem [shape: f32[2,1,1], index: 2, kind: output, shape index: {}]
  %s3 = sld [smem:[#allocation0]]
  $region57: #{tpu_custom_call.1} parent=0
    _
  %s5 = ssub.s32 1, %s3
  %s6 = scalar_select 0, %s5, %s3
  $region1: #{tpu_custom_call.1} parent=0
    #allocation3 [shape = 'u8[8192]{0}', space=vmem, size = 0x2000, scoped, tag = 'input window, operand 0']
    #allocation4 [shape = 's32[2]{0}', space=sflag, size = 0x8, scoped, tag = 'scoped memory for tpu_custom_call.1']
    #allocation5 [shape = 'u8[8192]{0}', space=vmem, size = 0x2000, scoped, tag = 'input window, operand 1']
    #allocation6 [shape = 's32[2]{0}', space=sflag, size = 0x8, scoped, tag = 'scoped memory for tpu_custom_call.1']
    %7 = vsyncpa [#allocation4], 0
    %s8 = scalar_lea.sflag [#allocation4], 1
    %9 = vsyncpa %s8, 0
    %10 = vsyncpa [#allocation6], 0
    %s11 = scalar_lea.sflag [#allocation6], 1
    %12 = vsyncpa %s11, 0
    loop: start=0, step=1, limit=4
    $region2: #{tpu_custom_call.1} parent=1 // loop_pre_header
      _
    $region3: #{tpu_custom_call.1} parent=1 // loop_header
      %s14 = sphi 0, %s18
      %p15 = scmp.ge.s32.totalorder %s14, 4
      %s21 = sphi 0, %s33
      %s22 = sphi 0, %s29
      %s23 = sphi 0, %s21
      %s24 = sphi 0, %s22
      %s25 = sphi 0, %s23
      %s26 = sphi 0, %s24
      %s42 = sphi 0, %s44
      %s45 = sphi 0, %s42
      %s46 = sphi 0, %s45
      %s62 = sphi 0, %s46
      %s74 = sphi 0, %s76
      %s77 = sphi 0, %s74
      %s78 = sphi 0, %s77
      %s94 = sphi 0, %s78
      %s100 = sphi 0, %s102
      %s103 = sphi 0, %s100
      %s104 = sphi 0, %s103
      %s120 = sphi 0, %s104
    $region4: #{tpu_custom_call.1} parent=1 // loop_header_branch
      %17 = sbr.rel (%p15) target = $region8
    $region5: #{tpu_custom_call.1} parent=1 // loop_body
      %s19 = ssub.s32 %s14, 1
      %s20 = ssub.s32 %s14, 2
      %s27 = sadd.s32 1, %s22
      %p28 = scmp.ge.s32.totalorder %s27, 1
      %s29 = scalar_select %p28, 0, %s27
      %s30 = sadd.s32 1, %s21
      %s31 = scalar_select %p28, %s30, %s21
      %p32 = scmp.ge.s32.totalorder %s31, 2
      %s33 = scalar_select %p32, 0, %s31
      %s34 = sadd.s32 %s21, %s22
      %p35 = scmp.lt.s32.totalorder %s34, 0
      %s36 = scalar_select %p35, %s34, 0
      %s37 = sadd.s32 %s33, %s29
      %p38 = scmp.lt.s32.totalorder %s37, 0
      %s39 = scalar_select %p38, %s37, 0
      %s40 = ssub.s32 %s36, %s39
      %p41 = scmp.eq.s32.totalorder %s40, 0
      %s43 = sadd.s32 %s42, 1
      %s44 = scalar_select %p41, %s42, %s43
      %p47 = pneg %p41
      %p48 = scmp.eq.s32.totalorder %s14, 1
      %p49 = por %p47, %p48
      %p50 = scmp.ne.s32.totalorder %s42, %s45
      %p51 = scmp.eq.s32.totalorder %s14, 0
      %p52 = por %p50, %p51
      %p53 = scmp.ne.s32.totalorder %s42, %s45
      %p54 = scmp.eq.s32.totalorder %s19, 1
      %p55 = por %p53, %p54
      %p56 = scmp.ne.s32.totalorder %s45, %s46
      %p57 = scmp.eq.s32.totalorder %s19, 0
      %p58 = por %p56, %p57
      %p59 = scmp.ne.s32.totalorder %s45, %s46
      %p60 = scmp.eq.s32.totalorder %s20, 1
      %p61 = por %p59, %p60
      %p63 = scmp.ne.s32.totalorder %s46, %s62
      %p64 = scmp.eq.s32.totalorder %s20, 0
      %p65 = por %p63, %p64
      %s66 = sadd.s32 %s21, %s22
      %p67 = scmp.lt.s32.totalorder %s66, 0
      %s68 = scalar_select %p67, %s66, 0
      %s69 = sadd.s32 %s33, %s29
      %p70 = scmp.lt.s32.totalorder %s69, 0
      %s71 = scalar_select %p70, %s69, 0
      %s72 = ssub.s32 %s68, %s71
      %p73 = scmp.eq.s32.totalorder %s72, 0
      %s75 = sadd.s32 %s74, 1
      %s76 = scalar_select %p73, %s74, %s75
      %p79 = pneg %p73
      %p80 = scmp.eq.s32.totalorder %s14, 1
      %p81 = por %p79, %p80
      %p82 = scmp.ne.s32.totalorder %s74, %s77
      %p83 = scmp.eq.s32.totalorder %s14, 0
      %p84 = por %p82, %p83
      %p85 = scmp.ne.s32.totalorder %s74, %s77
      %p86 = scmp.eq.s32.totalorder %s19, 1
      %p87 = por %p85, %p86
      %p88 = scmp.ne.s32.totalorder %s77, %s78
      %p89 = scmp.eq.s32.totalorder %s19, 0
      %p90 = por %p88, %p89
      %p91 = scmp.ne.s32.totalorder %s77, %s78
      %p92 = scmp.eq.s32.totalorder %s20, 1
      %p93 = por %p91, %p92
      %p95 = scmp.ne.s32.totalorder %s78, %s94
      %p96 = scmp.eq.s32.totalorder %s20, 0
      %p97 = por %p95, %p96
      %s98 = ssub.s32 %s21, %s33
      %p99 = scmp.eq.s32.totalorder %s98, 0
      %s101 = sadd.s32 %s100, 1
      %s102 = scalar_select %p99, %s100, %s101
      %p105 = pneg %p99
      %p106 = scmp.eq.s32.totalorder %s14, 1
      %p107 = por %p105, %p106
      %p108 = scmp.ne.s32.totalorder %s100, %s103
      %p109 = scmp.eq.s32.totalorder %s14, 0
      %p110 = por %p108, %p109
      %p111 = scmp.ne.s32.totalorder %s100, %s103
      %p112 = scmp.eq.s32.totalorder %s19, 1
      %p113 = por %p111, %p112
      %p114 = scmp.ne.s32.totalorder %s103, %s104
      %p115 = scmp.eq.s32.totalorder %s19, 0
      %p116 = por %p114, %p115
      %p117 = scmp.ne.s32.totalorder %s103, %s104
      %p118 = scmp.eq.s32.totalorder %s20, 1
      %p119 = por %p117, %p118
      %p121 = scmp.ne.s32.totalorder %s104, %s120
      %p122 = scmp.eq.s32.totalorder %s20, 0
      %p123 = por %p121, %p122
      %p124 = scmp.le.s32.totalorder 1, %s14
      %p125 = scmp.lt.s32.totalorder %s14, 3
      %p126 = pnand %p124, %p125
      %p127 = pneg %p126
      // Predicated region
      $region9: #{tpu_custom_call.1} parent=5 // pred_check
        _
      $region10: #{tpu_custom_call.1} parent=5 // pred_check_branch
        %129 = sbr.rel (%p126) target = $region12
      $region11: #{tpu_custom_call.1} parent=5 // pred_region
        %s130 = ssub.s32 %s14, 1
      $region12: #{tpu_custom_call.1} parent=5 // pred_fallthru
        _
      %p131 = scmp.lt.s32.totalorder %s14, 2
      // Predicated region
      $region13: #{tpu_custom_call.1} parent=5 // pred_check
        %p132 = pneg %p131
      $region14: #{tpu_custom_call.1} parent=5 // pred_check_branch
        %134 = sbr.rel (%p132) target = $region16
      $region15: #{tpu_custom_call.1} parent=5 // pred_region
        // Predicated region
        $region17: #{tpu_custom_call.1} parent=15 // pred_check
          %p135 = pneg %p52
        $region18: #{tpu_custom_call.1} parent=15 // pred_check_branch
          %137 = sbr.rel (%p135) target = $region20
        $region19: #{tpu_custom_call.1} parent=15 // pred_region
          %s138 = sand.u32 %s42, 1
          %s139 = scalar_lea.sflag [#allocation4], %s138
          %s140 = sand.u32 %s42, 1
          %s141 = smul.addr %s140, 8
          %s142 = scalar_lea.vmem [#allocation3], %s141
          %s143 = sadd.s32 %s21, %s22
          %p144 = scmp.lt.s32.totalorder %s143, 0
          %s145 = scalar_select %p144, %s143, 0
          %s147 = ssub.s32 128, 128
          %148 = vsyncadd %s139, %s147
          %s149 = smul.addr %s145, 128
          %s150 = scalar_lea.hbm %s0, %s149
          %s152 = sshll.u32 %s142, 4
          %s153 = int_to_ptr.vmem [resolvable:$true] %s152
          %155 = dma.hbm_to_vmem [thread:$0]  %s150, 128, %s153, %s139
        $region20: #{tpu_custom_call.1} parent=15 // pred_fallthru
          _
        // Predicated region
        $region21: #{tpu_custom_call.1} parent=15 // pred_check
          %p156 = pneg %p84
        $region22: #{tpu_custom_call.1} parent=15 // pred_check_branch
          %158 = sbr.rel (%p156) target = $region24
        $region23: #{tpu_custom_call.1} parent=15 // pred_region
          %s159 = sand.u32 %s74, 1
          %s160 = scalar_lea.sflag [#allocation6], %s159
          %s161 = sand.u32 %s74, 1
          %s162 = smul.addr %s161, 8
          %s163 = scalar_lea.vmem [#allocation5], %s162
          %s164 = sadd.s32 %s21, %s22
          %p165 = scmp.lt.s32.totalorder %s164, 0
          %s166 = scalar_select %p165, %s164, 0
          %s168 = ssub.s32 128, 128
          %169 = vsyncadd %s160, %s168
          %s170 = smul.addr %s166, 128
          %s171 = scalar_lea.hbm %s1, %s170
          %s173 = sshll.u32 %s163, 4
          %s174 = int_to_ptr.vmem [resolvable:$true] %s173
          %176 = dma.hbm_to_vmem [thread:$0]  %s171, 128, %s174, %s160
        $region24: #{tpu_custom_call.1} parent=15 // pred_fallthru
          _
      $region16: #{tpu_custom_call.1} parent=5 // pred_fallthru
        _
      %p177 = scmp.le.s32.totalorder 1, %s14
      %p178 = scmp.lt.s32.totalorder %s14, 3
      %p179 = pnand %p177, %p178
      %p180 = pneg %p179
      // Predicated region
      $region25: #{tpu_custom_call.1} parent=5 // pred_check
        _
      $region26: #{tpu_custom_call.1} parent=5 // pred_check_branch
        %182 = sbr.rel (%p179) target = $region28
      $region27: #{tpu_custom_call.1} parent=5 // pred_region
        %s183 = ssub.s32 %s14, 1
        %s184 = sand.u32 %s45, 1
        %s185 = scalar_lea.sflag [#allocation4], %s184
        %s186 = sand.u32 %s45, 1
        %s187 = smul.addr %s186, 8
        %s188 = scalar_lea.vmem [#allocation3], %s187
        // Predicated region
        $region29: #{tpu_custom_call.1} parent=27 // pred_check
          %p189 = pneg %p58
        $region30: #{tpu_custom_call.1} parent=27 // pred_check_branch
          %191 = sbr.rel (%p189) target = $region32
        $region31: #{tpu_custom_call.1} parent=27 // pred_region
          %192 = dma.done %s185, 128
        $region32: #{tpu_custom_call.1} parent=27 // pred_fallthru
          _
        %s193 = sand.u32 %s77, 1
        %s194 = scalar_lea.sflag [#allocation6], %s193
        %s195 = sand.u32 %s77, 1
        %s196 = smul.addr %s195, 8
        %s197 = scalar_lea.vmem [#allocation5], %s196
        // Predicated region
        $region33: #{tpu_custom_call.1} parent=27 // pred_check
          %p198 = pneg %p90
        $region34: #{tpu_custom_call.1} parent=27 // pred_check_branch
          %200 = sbr.rel (%p198) target = $region36
        $region35: #{tpu_custom_call.1} parent=27 // pred_region
          %201 = dma.done %s194, 128
        $region36: #{tpu_custom_call.1} parent=27 // pred_fallthru
          _
        %s202 = sand.u32 %s45, 1
        %s203 = scalar_lea.sflag [#allocation4], %s202
        %s204 = sand.u32 %s45, 1
        %s205 = smul.addr %s204, 8
        %s206 = scalar_lea.vmem [#allocation3], %s205
        %p207 = pneg %p58
        %p208 = pneg %p55
        %s209 = sand.u32 %s77, 1
        %s210 = scalar_lea.sflag [#allocation6], %s209
        %s211 = sand.u32 %s77, 1
        %s212 = smul.addr %s211, 8
        %s213 = scalar_lea.vmem [#allocation5], %s212
        %p214 = pneg %p90
        %p215 = pneg %p87
        %p216 = pneg %p116
        %p217 = pneg %p113
        %p218 = scmp.lt.s32.totalorder %s23, 1
        %s219 = scalar_select %p218, %s23, 1
        %s220 = scalar_lea.vmem %s2, %s219
        %s221 = sadd.s32 %s23, %s24
        %p222 = scmp.lt.s32.totalorder %s221, 0
        %s223 = scalar_select %p222, %s221, 0
        %s224 = sadd.s32 %s23, %s24
        %p225 = scmp.lt.s32.totalorder %s224, 0
        %s226 = scalar_select %p225, %s224, 0
        %p227 = scmp.lt.s32.totalorder %s23, 1
        %s228 = scalar_select %p227, %s23, 1
        %s229 = scalar_lea.vmem %s2, %s228
        %p230 = scmp.eq.s32.totalorder %s24, 0
        // Predicated region
        $region37: #{tpu_custom_call.1} parent=27 // pred_check
          %p231 = pneg %p230
        $region38: #{tpu_custom_call.1} parent=27 // pred_check_branch
          %233 = sbr.rel (%p231) target = $region40
        $region39: #{tpu_custom_call.1} parent=27 // pred_region
          %vm234 = vcmask 0
          %235 = vst.msk [vmem:[#allocation2] sm:$0x1] %vm234, 0.0
        $region40: #{tpu_custom_call.1} parent=27 // pred_fallthru
          _
        %v236 = vld [vmem:[%s188] sm:$0xff]
        %v237 = vld [vmem:[%s197] sm:$0xff]
        %vm238 = vcmask 261120
        %v239 = vsel %vm238, %v236, -inf
        %240 = vmax.xlane.f32.xlu0 %v239
        %v241 = vpop.xlane.xlu0 %240
        %v242 = vsub.f32 %v236, %v241
        %v243 = vmul.f32 %v242, 1.442695
        %v244 = vpow.pop %v243
        %v246 = vsel %vm238, %v244, 0
        %248 = vmatprep.subr.mxu0 0.0
        %249 = vmatpush1.msra.mxu0 0.0
        %250 = vmatprep.subr.mxu0 0.0
        %251 = vmatpush1.msra.mxu0 0.0
        %252 = vmatprep.subr.mxu0 0.0
        %253 = vmatpush1.msra.mxu0 0.0
        %254 = vmatprep.subr.mxu0 0.0
        %255 = vmatpush1.msra.mxu0 0.0
        %256 = vmatprep.subr.mxu0 0.0
        %257 = vmatpush1.msra.mxu0 0.0
        %258 = vmatprep.subr.mxu0 0.0
        %259 = vmatpush1.msra.mxu0 0.0
        %260 = vmatprep.subr.mxu0 0.0
        %261 = vmatpush1.msra.mxu0 0.0
        %262 = vmatprep.subr.mxu0 0.0
        %263 = vmatpush1.msra.mxu0 0.0
        %264 = vmatprep.subr.mxu0 0.0
        %265 = vmatpush1.msra.mxu0 0.0
        %266 = vmatprep.subr.mxu0 0.0
        %267 = vmatpush1.msra.mxu0 0.0
        %268 = vmatprep.subr.mxu0 0.0
        %269 = vmatpush1.msra.mxu0 0.0
        %270 = vmatprep.subr.mxu0 0.0
        %271 = vmatpush1.msra.mxu0 0.0
        %272 = vmatprep.subr.mxu0 0.0
        %273 = vmatpush1.msra.mxu0 1.0
        %274 = vmatprep.subr.mxu0 0.0
        %275 = vmatpush1.msra.mxu0 1.0
        %276 = vmatprep.subr.mxu0 0.0
        %277 = vmatpush1.msra.mxu0 1.0
        %278 = vmatprep.subr.mxu0 0.0
        %279 = vmatpush1.msra.mxu0 1.0
        %280 = vmatprep.subr.mxu0 0.0
        %281 = vmatpush2.msra.mxu0 0.0
        %282 = vmatprep.subr.mxu0 0.0
        %283 = vmatpush2.msra.mxu0 0.0
        %284 = vmatprep.subr.mxu0 0.0
        %285 = vmatpush2.msra.mxu0 0.0
        %286 = vmatprep.subr.mxu0 0.0
        %287 = vmatpush2.msra.mxu0 0.0
        %288 = vmatprep.subr.mxu0 0.0
        %289 = vmatpush2.msra.mxu0 0.0
        %290 = vmatprep.subr.mxu0 0.0
        %291 = vmatpush2.msra.mxu0 0.0
        %292 = vmatprep.subr.mxu0 0.0
        %293 = vmatpush2.msra.mxu0 0.0
        %294 = vmatprep.subr.mxu0 0.0
        %295 = vmatpush2.msra.mxu0 0.0
        %296 = vmatprep.subr.mxu0 0.0
        %297 = vmatpush2.msra.mxu0 0.0
        %298 = vmatprep.subr.mxu0 0.0
        %299 = vmatpush2.msra.mxu0 0.0
        %300 = vmatprep.subr.mxu0 0.0
        %301 = vmatpush2.msra.mxu0 0.0
        %302 = vmatprep.subr.mxu0 0.0
        %303 = vmatpush2.msra.mxu0 0.0
        %304 = vmatprep.subr.mxu0 0.0
        %305 = vmatpush2.msra.mxu0 0.0
        %306 = vmatprep.subr.mxu0 0.0
        %307 = vmatpush2.msra.mxu0 0.0
        %308 = vmatprep.subr.mxu0 0.0
        %309 = vmatpush2.msra.mxu0 0.0
        %310 = vmatprep.subr.mxu0 0.0
        %311 = vmatpush2.msra.mxu0 0.0
        %312 = vmatprep.mubr.f32.mxu0 0.0
        %v313 = vand.u32 %v246, 4294901760
        %v314 = vsub.f32 %v246, %v313
        %v315 = vand.u32 %v314, 4294901760
        %v316 = vsub.f32 %v314, %v315
        %v317 = vand.u32 %v316, 4294901760
        %318 = vmatmul.mubr.f32.gmra.mxu0 %v317
        %v319 = vpop.f32.mrf.mxu0
        %v320 = vadd.f32 0.0, %v319
        %v321 = vpop.f32.mrf.mxu0
        %322 = vdwg.mxu0
        %323 = vmatprep.subr.mxu0 0.0
        %324 = vmatpush1.msra.mxu0 0.0
        %325 = vmatprep.subr.mxu0 0.0
        %326 = vmatpush1.msra.mxu0 0.0
        %327 = vmatprep.subr.mxu0 0.0
        %328 = vmatpush1.msra.mxu0 0.0
        %329 = vmatprep.subr.mxu0 0.0
        %330 = vmatpush1.msra.mxu0 0.0
        %331 = vmatprep.subr.mxu0 0.0
        %332 = vmatpush1.msra.mxu0 0.0
        %333 = vmatprep.subr.mxu0 0.0
        %334 = vmatpush1.msra.mxu0 0.0
        %335 = vmatprep.subr.mxu0 0.0
        %336 = vmatpush1.msra.mxu0 0.0
        %337 = vmatprep.subr.mxu0 0.0
        %338 = vmatpush1.msra.mxu0 0.0
        %339 = vmatprep.subr.mxu0 0.0
        %340 = vmatpush1.msra.mxu0 0.0
        %341 = vmatprep.subr.mxu0 0.0
        %342 = vmatpush1.msra.mxu0 0.0
        %343 = vmatprep.subr.mxu0 0.0
        %344 = vmatpush1.msra.mxu0 0.0
        %345 = vmatprep.subr.mxu0 0.0
        %346 = vmatpush1.msra.mxu0 0.0
        %347 = vmatprep.subr.mxu0 0.0
        %348 = vmatpush1.msra.mxu0 0.0
        %349 = vmatprep.subr.mxu0 0.0
        %350 = vmatpush1.msra.mxu0 0.0
        %351 = vmatprep.subr.mxu0 0.0
        %352 = vmatpush1.msra.mxu0 0.0
        %353 = vmatprep.subr.mxu0 0.0
        %354 = vmatpush1.msra.mxu0 0.0
        %355 = vmatprep.subr.mxu0 0.0
        %356 = vmatpush2.msra.mxu0 0.0
        %357 = vmatprep.subr.mxu0 0.0
        %358 = vmatpush2.msra.mxu0 0.0
        %359 = vmatprep.subr.mxu0 0.0
        %360 = vmatpush2.msra.mxu0 0.0
        %361 = vmatprep.subr.mxu0 0.0
        %362 = vmatpush2.msra.mxu0 0.0
        %363 = vmatprep.subr.mxu0 0.0
        %364 = vmatpush2.msra.mxu0 0.0
        %365 = vmatprep.subr.mxu0 0.0
        %366 = vmatpush2.msra.mxu0 0.0
        %367 = vmatprep.subr.mxu0 0.0
        %368 = vmatpush2.msra.mxu0 0.0
        %369 = vmatprep.subr.mxu0 0.0
        %370 = vmatpush2.msra.mxu0 0.0
        %371 = vmatprep.subr.mxu0 0.0
        %372 = vmatpush2.msra.mxu0 0.0
        %373 = vmatprep.subr.mxu0 0.0
        %374 = vmatpush2.msra.mxu0 0.0
        %375 = vmatprep.subr.mxu0 0.0
        %376 = vmatpush2.msra.mxu0 0.0
        %377 = vmatprep.subr.mxu0 0.0
        %378 = vmatpush2.msra.mxu0 0.0
        %379 = vmatprep.subr.mxu0 0.0
        %380 = vmatpush2.msra.mxu0 0.0
        %381 = vmatprep.subr.mxu0 0.0
        %382 = vmatpush2.msra.mxu0 0.0
        %383 = vmatprep.subr.mxu0 0.0
        %384 = vmatpush2.msra.mxu0 0.0
        %385 = vmatprep.subr.mxu0 0.0
        %386 = vmatpush2.msra.mxu0 0.0
        %387 = vmatprep.mubr.f32.mxu0 0.0
        %v388 = vand.u32 %v246, 4294901760
        %389 = vmatmul.mubr.f32.gmra.mxu0 %v388
        %v390 = vpop.f32.mrf.mxu0
        %v391 = vadd.f32 %v320, %v390
        %v392 = vpop.f32.mrf.mxu0
        %393 = vdwg.mxu0
        %394 = vmatprep.subr.mxu0 0.0
        %395 = vmatpush1.msra.mxu0 0.0
        %396 = vmatprep.subr.mxu0 0.0
        %397 = vmatpush1.msra.mxu0 0.0
        %398 = vmatprep.subr.mxu0 0.0
        %399 = vmatpush1.msra.mxu0 0.0
        %400 = vmatprep.subr.mxu0 0.0
        %401 = vmatpush1.msra.mxu0 0.0
        %402 = vmatprep.subr.mxu0 0.0
        %403 = vmatpush1.msra.mxu0 0.0
        %404 = vmatprep.subr.mxu0 0.0
        %405 = vmatpush1.msra.mxu0 0.0
        %406 = vmatprep.subr.mxu0 0.0
        %407 = vmatpush1.msra.mxu0 0.0
        %408 = vmatprep.subr.mxu0 0.0
        %409 = vmatpush1.msra.mxu0 0.0
        %410 = vmatprep.subr.mxu0 0.0
        %411 = vmatpush1.msra.mxu0 0.0
        %412 = vmatprep.subr.mxu0 0.0
        %413 = vmatpush1.msra.mxu0 0.0
        %414 = vmatprep.subr.mxu0 0.0
        %415 = vmatpush1.msra.mxu0 0.0
        %416 = vmatprep.subr.mxu0 0.0
        %417 = vmatpush1.msra.mxu0 0.0
        %418 = vmatprep.subr.mxu0 0.0
        %419 = vmatpush1.msra.mxu0 0.0
        %420 = vmatprep.subr.mxu0 0.0
        %421 = vmatpush1.msra.mxu0 0.0
        %422 = vmatprep.subr.mxu0 0.0
        %423 = vmatpush1.msra.mxu0 0.0
        %424 = vmatprep.subr.mxu0 0.0
        %425 = vmatpush1.msra.mxu0 0.0
        %426 = vmatprep.subr.mxu0 0.0
        %427 = vmatpush2.msra.mxu0 0.0
        %428 = vmatprep.subr.mxu0 0.0
        %429 = vmatpush2.msra.mxu0 0.0
        %430 = vmatprep.subr.mxu0 0.0
        %431 = vmatpush2.msra.mxu0 0.0
        %432 = vmatprep.subr.mxu0 0.0
        %433 = vmatpush2.msra.mxu0 0.0
        %434 = vmatprep.subr.mxu0 0.0
        %435 = vmatpush2.msra.mxu0 0.0
        %436 = vmatprep.subr.mxu0 0.0
        %437 = vmatpush2.msra.mxu0 0.0
        %438 = vmatprep.subr.mxu0 0.0
        %439 = vmatpush2.msra.mxu0 0.0
        %440 = vmatprep.subr.mxu0 0.0
        %441 = vmatpush2.msra.mxu0 0.0
        %442 = vmatprep.subr.mxu0 0.0
        %443 = vmatpush2.msra.mxu0 0.0
        %444 = vmatprep.subr.mxu0 0.0
        %445 = vmatpush2.msra.mxu0 0.0
        %446 = vmatprep.subr.mxu0 0.0
        %447 = vmatpush2.msra.mxu0 0.0
        %448 = vmatprep.subr.mxu0 0.0
        %449 = vmatpush2.msra.mxu0 0.0
        %450 = vmatprep.subr.mxu0 0.0
        %451 = vmatpush2.msra.mxu0 0.0
        %452 = vmatprep.subr.mxu0 0.0
        %453 = vmatpush2.msra.mxu0 0.0
        %454 = vmatprep.subr.mxu0 0.0
        %455 = vmatpush2.msra.mxu0 0.0
        %456 = vmatprep.subr.mxu0 0.0
        %457 = vmatpush2.msra.mxu0 0.0
        %458 = vmatprep.mubr.f32.mxu0 0.0
        %v459 = vand.u32 %v246, 4294901760
        %v460 = vsub.f32 %v246, %v459
        %461 = vmatmul.mubr.f32.gmra.mxu0 %v460
        %v462 = vpop.f32.mrf.mxu0
        %v463 = vadd.f32 %v391, %v462
        %v464 = vpop.f32.mrf.mxu0
        %465 = vdwg.mxu0
        %466 = vmatprep.subr.mxu0 0.0
        %467 = vmatpush1.msra.mxu0 0.0
        %468 = vmatprep.subr.mxu0 0.0
        %469 = vmatpush1.msra.mxu0 0.0
        %470 = vmatprep.subr.mxu0 0.0
        %471 = vmatpush1.msra.mxu0 0.0
        %472 = vmatprep.subr.mxu0 0.0
        %473 = vmatpush1.msra.mxu0 0.0
        %474 = vmatprep.subr.mxu0 0.0
        %475 = vmatpush1.msra.mxu0 0.0
        %476 = vmatprep.subr.mxu0 0.0
        %477 = vmatpush1.msra.mxu0 0.0
        %478 = vmatprep.subr.mxu0 0.0
        %479 = vmatpush1.msra.mxu0 0.0
        %480 = vmatprep.subr.mxu0 0.0
        %481 = vmatpush1.msra.mxu0 0.0
        %482 = vmatprep.subr.mxu0 0.0
        %483 = vmatpush1.msra.mxu0 0.0
        %484 = vmatprep.subr.mxu0 0.0
        %485 = vmatpush1.msra.mxu0 0.0
        %486 = vmatprep.subr.mxu0 0.0
        %487 = vmatpush1.msra.mxu0 0.0
        %488 = vmatprep.subr.mxu0 0.0
        %489 = vmatpush1.msra.mxu0 0.0
        %490 = vmatprep.subr.mxu0 0.0
        %491 = vmatpush1.msra.mxu0 1.0
        %492 = vmatprep.subr.mxu0 0.0
        %493 = vmatpush1.msra.mxu0 1.0
        %494 = vmatprep.subr.mxu0 0.0
        %495 = vmatpush1.msra.mxu0 1.0
        %496 = vmatprep.subr.mxu0 0.0
        %497 = vmatpush1.msra.mxu0 1.0
        %498 = vmatprep.subr.mxu0 0.0
        %499 = vmatpush2.msra.mxu0 0.0
        %500 = vmatprep.subr.mxu0 0.0
        %501 = vmatpush2.msra.mxu0 0.0
        %502 = vmatprep.subr.mxu0 0.0
        %503 = vmatpush2.msra.mxu0 0.0
        %504 = vmatprep.subr.mxu0 0.0
        %505 = vmatpush2.msra.mxu0 0.0
        %506 = vmatprep.subr.mxu0 0.0
        %507 = vmatpush2.msra.mxu0 0.0
        %508 = vmatprep.subr.mxu0 0.0
        %509 = vmatpush2.msra.mxu0 0.0
        %510 = vmatprep.subr.mxu0 0.0
        %511 = vmatpush2.msra.mxu0 0.0
        %512 = vmatprep.subr.mxu0 0.0
        %513 = vmatpush2.msra.mxu0 0.0
        %514 = vmatprep.subr.mxu0 0.0
        %515 = vmatpush2.msra.mxu0 0.0
        %516 = vmatprep.subr.mxu0 0.0
        %517 = vmatpush2.msra.mxu0 0.0
        %518 = vmatprep.subr.mxu0 0.0
        %519 = vmatpush2.msra.mxu0 0.0
        %520 = vmatprep.subr.mxu0 0.0
        %521 = vmatpush2.msra.mxu0 0.0
        %522 = vmatprep.subr.mxu0 0.0
        %523 = vmatpush2.msra.mxu0 0.0
        %524 = vmatprep.subr.mxu0 0.0
        %525 = vmatpush2.msra.mxu0 0.0
        %526 = vmatprep.subr.mxu0 0.0
        %527 = vmatpush2.msra.mxu0 0.0
        %528 = vmatprep.subr.mxu0 0.0
        %529 = vmatpush2.msra.mxu0 0.0
        %530 = vmatprep.mubr.f32.mxu0 0.0
        %v531 = vand.u32 %v246, 4294901760
        %v532 = vsub.f32 %v246, %v531
        %v533 = vand.u32 %v532, 4294901760
        %534 = vmatmul.mubr.f32.gmra.mxu0 %v533
        %v535 = vpop.f32.mrf.mxu0
        %v536 = vadd.f32 %v463, %v535
        %v537 = vpop.f32.mrf.mxu0
        %538 = vdwg.mxu0
        %539 = vmatprep.subr.mxu0 0.0
        %540 = vmatpush1.msra.mxu0 0.0
        %541 = vmatprep.subr.mxu0 0.0
        %542 = vmatpush1.msra.mxu0 0.0
        %543 = vmatprep.subr.mxu0 0.0
        %544 = vmatpush1.msra.mxu0 0.0
        %545 = vmatprep.subr.mxu0 0.0
        %546 = vmatpush1.msra.mxu0 0.0
        %547 = vmatprep.subr.mxu0 0.0
        %548 = vmatpush1.msra.mxu0 0.0
        %549 = vmatprep.subr.mxu0 0.0
        %550 = vmatpush1.msra.mxu0 0.0
        %551 = vmatprep.subr.mxu0 0.0
        %552 = vmatpush1.msra.mxu0 0.0
        %553 = vmatprep.subr.mxu0 0.0
        %554 = vmatpush1.msra.mxu0 0.0
        %555 = vmatprep.subr.mxu0 0.0
        %556 = vmatpush1.msra.mxu0 0.0
        %557 = vmatprep.subr.mxu0 0.0
        %558 = vmatpush1.msra.mxu0 0.0
        %559 = vmatprep.subr.mxu0 0.0
        %560 = vmatpush1.msra.mxu0 0.0
        %561 = vmatprep.subr.mxu0 0.0
        %562 = vmatpush1.msra.mxu0 0.0
        %563 = vmatprep.subr.mxu0 0.0
        %564 = vmatpush1.msra.mxu0 0.0
        %565 = vmatprep.subr.mxu0 0.0
        %566 = vmatpush1.msra.mxu0 0.0
        %567 = vmatprep.subr.mxu0 0.0
        %568 = vmatpush1.msra.mxu0 0.0
        %569 = vmatprep.subr.mxu0 0.0
        %570 = vmatpush1.msra.mxu0 0.0
        %571 = vmatprep.subr.mxu0 0.0
        %572 = vmatpush2.msra.mxu0 0.0
        %573 = vmatprep.subr.mxu0 0.0
        %574 = vmatpush2.msra.mxu0 0.0
        %575 = vmatprep.subr.mxu0 0.0
        %576 = vmatpush2.msra.mxu0 0.0
        %577 = vmatprep.subr.mxu0 0.0
        %578 = vmatpush2.msra.mxu0 0.0
        %579 = vmatprep.subr.mxu0 0.0
        %580 = vmatpush2.msra.mxu0 0.0
        %581 = vmatprep.subr.mxu0 0.0
        %582 = vmatpush2.msra.mxu0 0.0
        %583 = vmatprep.subr.mxu0 0.0
        %584 = vmatpush2.msra.mxu0 0.0
        %585 = vmatprep.subr.mxu0 0.0
        %586 = vmatpush2.msra.mxu0 0.0
        %587 = vmatprep.subr.mxu0 0.0
        %588 = vmatpush2.msra.mxu0 0.0
        %589 = vmatprep.subr.mxu0 0.0
        %590 = vmatpush2.msra.mxu0 0.0
        %591 = vmatprep.subr.mxu0 0.0
        %592 = vmatpush2.msra.mxu0 0.0
        %593 = vmatprep.subr.mxu0 0.0
        %594 = vmatpush2.msra.mxu0 0.0
        %595 = vmatprep.subr.mxu0 0.0
        %596 = vmatpush2.msra.mxu0 0.0
        %597 = vmatprep.subr.mxu0 0.0
        %598 = vmatpush2.msra.mxu0 0.0
        %599 = vmatprep.subr.mxu0 0.0
        %600 = vmatpush2.msra.mxu0 0.0
        %601 = vmatprep.subr.mxu0 0.0
        %602 = vmatpush2.msra.mxu0 0.0
        %603 = vmatprep.mubr.f32.mxu0 0.0
        %v604 = vand.u32 %v246, 4294901760
        %605 = vmatmul.mubr.f32.gmra.mxu0 %v604
        %v606 = vpop.f32.mrf.mxu0
        %v607 = vadd.f32 %v536, %v606
        %v608 = vpop.f32.mrf.mxu0
        %609 = vdwg.mxu0
        %610 = vmatprep.subr.mxu0 0.0
        %611 = vmatpush1.msra.mxu0 0.0
        %612 = vmatprep.subr.mxu0 0.0
        %613 = vmatpush1.msra.mxu0 0.0
        %614 = vmatprep.subr.mxu0 0.0
        %615 = vmatpush1.msra.mxu0 0.0
        %616 = vmatprep.subr.mxu0 0.0
        %617 = vmatpush1.msra.mxu0 0.0
        %618 = vmatprep.subr.mxu0 0.0
        %619 = vmatpush1.msra.mxu0 0.0
        %620 = vmatprep.subr.mxu0 0.0
        %621 = vmatpush1.msra.mxu0 0.0
        %622 = vmatprep.subr.mxu0 0.0
        %623 = vmatpush1.msra.mxu0 0.0
        %624 = vmatprep.subr.mxu0 0.0
        %625 = vmatpush1.msra.mxu0 0.0
        %626 = vmatprep.subr.mxu0 0.0
        %627 = vmatpush1.msra.mxu0 0.0
        %628 = vmatprep.subr.mxu0 0.0
        %629 = vmatpush1.msra.mxu0 0.0
        %630 = vmatprep.subr.mxu0 0.0
        %631 = vmatpush1.msra.mxu0 0.0
        %632 = vmatprep.subr.mxu0 0.0
        %633 = vmatpush1.msra.mxu0 0.0
        %634 = vmatprep.subr.mxu0 0.0
        %635 = vmatpush1.msra.mxu0 1.0
        %636 = vmatprep.subr.mxu0 0.0
        %637 = vmatpush1.msra.mxu0 1.0
        %638 = vmatprep.subr.mxu0 0.0
        %639 = vmatpush1.msra.mxu0 1.0
        %640 = vmatprep.subr.mxu0 0.0
        %641 = vmatpush1.msra.mxu0 1.0
        %642 = vmatprep.subr.mxu0 0.0
        %643 = vmatpush2.msra.mxu0 0.0
        %644 = vmatprep.subr.mxu0 0.0
        %645 = vmatpush2.msra.mxu0 0.0
        %646 = vmatprep.subr.mxu0 0.0
        %647 = vmatpush2.msra.mxu0 0.0
        %648 = vmatprep.subr.mxu0 0.0
        %649 = vmatpush2.msra.mxu0 0.0
        %650 = vmatprep.subr.mxu0 0.0
        %651 = vmatpush2.msra.mxu0 0.0
        %652 = vmatprep.subr.mxu0 0.0
        %653 = vmatpush2.msra.mxu0 0.0
        %654 = vmatprep.subr.mxu0 0.0
        %655 = vmatpush2.msra.mxu0 0.0
        %656 = vmatprep.subr.mxu0 0.0
        %657 = vmatpush2.msra.mxu0 0.0
        %658 = vmatprep.subr.mxu0 0.0
        %659 = vmatpush2.msra.mxu0 0.0
        %660 = vmatprep.subr.mxu0 0.0
        %661 = vmatpush2.msra.mxu0 0.0
        %662 = vmatprep.subr.mxu0 0.0
        %663 = vmatpush2.msra.mxu0 0.0
        %664 = vmatprep.subr.mxu0 0.0
        %665 = vmatpush2.msra.mxu0 0.0
        %666 = vmatprep.subr.mxu0 0.0
        %667 = vmatpush2.msra.mxu0 0.0
        %668 = vmatprep.subr.mxu0 0.0
        %669 = vmatpush2.msra.mxu0 0.0
        %670 = vmatprep.subr.mxu0 0.0
        %671 = vmatpush2.msra.mxu0 0.0
        %672 = vmatprep.subr.mxu0 0.0
        %673 = vmatpush2.msra.mxu0 0.0
        %674 = vmatprep.mubr.f32.mxu0 0.0
        %v675 = vand.u32 %v246, 4294901760
        %676 = vmatmul.mubr.f32.gmra.mxu0 %v675
        %v677 = vpop.f32.mrf.mxu0
        %v678 = vadd.f32 %v607, %v677
        %v679 = vpop.f32.mrf.mxu0
        %680 = vdwg.mxu0
        %682 = vrot.lane.b32.xlu0 %v242, 2
        %v683 = vpop.permute.xlu0 %682
        %v685 = vmul.f32 %v237, %v683
        %687 = vrot.lane.b32.xlu0 %v685, 126
        %v688 = vpop.permute.xlu0 %687
        %v689 = vsel %vm238, %v688, 0
        %691 = vmatprep.subr.mxu0 0.0
        %692 = vmatpush1.msra.mxu0 0.0
        %693 = vmatprep.subr.mxu0 0.0
        %694 = vmatpush1.msra.mxu0 0.0
        %695 = vmatprep.subr.mxu0 0.0
        %696 = vmatpush1.msra.mxu0 0.0
        %697 = vmatprep.subr.mxu0 0.0
        %698 = vmatpush1.msra.mxu0 0.0
        %699 = vmatprep.subr.mxu0 0.0
        %700 = vmatpush1.msra.mxu0 0.0
        %701 = vmatprep.subr.mxu0 0.0
        %702 = vmatpush1.msra.mxu0 0.0
        %703 = vmatprep.subr.mxu0 0.0
        %704 = vmatpush1.msra.mxu0 0.0
        %705 = vmatprep.subr.mxu0 0.0
        %706 = vmatpush1.msra.mxu0 0.0
        %707 = vmatprep.subr.mxu0 0.0
        %708 = vmatpush1.msra.mxu0 0.0
        %709 = vmatprep.subr.mxu0 0.0
        %710 = vmatpush1.msra.mxu0 0.0
        %711 = vmatprep.subr.mxu0 0.0
        %712 = vmatpush1.msra.mxu0 0.0
        %713 = vmatprep.subr.mxu0 0.0
        %714 = vmatpush1.msra.mxu0 0.0
        %715 = vmatprep.subr.mxu0 0.0
        %716 = vmatpush1.msra.mxu0 1.0
        %717 = vmatprep.subr.mxu0 0.0
        %718 = vmatpush1.msra.mxu0 1.0
        %719 = vmatprep.subr.mxu0 0.0
        %720 = vmatpush1.msra.mxu0 1.0
        %721 = vmatprep.subr.mxu0 0.0
        %722 = vmatpush1.msra.mxu0 1.0
        %723 = vmatprep.subr.mxu0 0.0
        %724 = vmatpush2.msra.mxu0 0.0
        %725 = vmatprep.subr.mxu0 0.0
        %726 = vmatpush2.msra.mxu0 0.0
        %727 = vmatprep.subr.mxu0 0.0
        %728 = vmatpush2.msra.mxu0 0.0
        %729 = vmatprep.subr.mxu0 0.0
        %730 = vmatpush2.msra.mxu0 0.0
        %731 = vmatprep.subr.mxu0 0.0
        %732 = vmatpush2.msra.mxu0 0.0
        %733 = vmatprep.subr.mxu0 0.0
        %734 = vmatpush2.msra.mxu0 0.0
        %735 = vmatprep.subr.mxu0 0.0
        %736 = vmatpush2.msra.mxu0 0.0
        %737 = vmatprep.subr.mxu0 0.0
        %738 = vmatpush2.msra.mxu0 0.0
        %739 = vmatprep.subr.mxu0 0.0
        %740 = vmatpush2.msra.mxu0 0.0
        %741 = vmatprep.subr.mxu0 0.0
        %742 = vmatpush2.msra.mxu0 0.0
        %743 = vmatprep.subr.mxu0 0.0
        %744 = vmatpush2.msra.mxu0 0.0
        %745 = vmatprep.subr.mxu0 0.0
        %746 = vmatpush2.msra.mxu0 0.0
        %747 = vmatprep.subr.mxu0 0.0
        %748 = vmatpush2.msra.mxu0 0.0
        %749 = vmatprep.subr.mxu0 0.0
        %750 = vmatpush2.msra.mxu0 0.0
        %751 = vmatprep.subr.mxu0 0.0
        %752 = vmatpush2.msra.mxu0 0.0
        %753 = vmatprep.subr.mxu0 0.0
        %754 = vmatpush2.msra.mxu0 0.0
        %755 = vmatprep.mubr.f32.mxu0 0.0
        %v756 = vand.u32 %v689, 4294901760
        %v757 = vsub.f32 %v689, %v756
        %v758 = vand.u32 %v757, 4294901760
        %v759 = vsub.f32 %v757, %v758
        %v760 = vand.u32 %v759, 4294901760
        %761 = vmatmul.mubr.f32.gmra.mxu0 %v760
        %v762 = vpop.f32.mrf.mxu0
        %v763 = vadd.f32 0.0, %v762
        %v764 = vpop.f32.mrf.mxu0
        %765 = vdwg.mxu0
        %766 = vmatprep.subr.mxu0 0.0
        %767 = vmatpush1.msra.mxu0 0.0
        %768 = vmatprep.subr.mxu0 0.0
        %769 = vmatpush1.msra.mxu0 0.0
        %770 = vmatprep.subr.mxu0 0.0
        %771 = vmatpush1.msra.mxu0 0.0
        %772 = vmatprep.subr.mxu0 0.0
        %773 = vmatpush1.msra.mxu0 0.0
        %774 = vmatprep.subr.mxu0 0.0
        %775 = vmatpush1.msra.mxu0 0.0
        %776 = vmatprep.subr.mxu0 0.0
        %777 = vmatpush1.msra.mxu0 0.0
        %778 = vmatprep.subr.mxu0 0.0
        %779 = vmatpush1.msra.mxu0 0.0
        %780 = vmatprep.subr.mxu0 0.0
        %781 = vmatpush1.msra.mxu0 0.0
        %782 = vmatprep.subr.mxu0 0.0
        %783 = vmatpush1.msra.mxu0 0.0
        %784 = vmatprep.subr.mxu0 0.0
        %785 = vmatpush1.msra.mxu0 0.0
        %786 = vmatprep.subr.mxu0 0.0
        %787 = vmatpush1.msra.mxu0 0.0
        %788 = vmatprep.subr.mxu0 0.0
        %789 = vmatpush1.msra.mxu0 0.0
        %790 = vmatprep.subr.mxu0 0.0
        %791 = vmatpush1.msra.mxu0 0.0
        %792 = vmatprep.subr.mxu0 0.0
        %793 = vmatpush1.msra.mxu0 0.0
        %794 = vmatprep.subr.mxu0 0.0
        %795 = vmatpush1.msra.mxu0 0.0
        %796 = vmatprep.subr.mxu0 0.0
        %797 = vmatpush1.msra.mxu0 0.0
        %798 = vmatprep.subr.mxu0 0.0
        %799 = vmatpush2.msra.mxu0 0.0
        %800 = vmatprep.subr.mxu0 0.0
        %801 = vmatpush2.msra.mxu0 0.0
        %802 = vmatprep.subr.mxu0 0.0
        %803 = vmatpush2.msra.mxu0 0.0
        %804 = vmatprep.subr.mxu0 0.0
        %805 = vmatpush2.msra.mxu0 0.0
        %806 = vmatprep.subr.mxu0 0.0
        %807 = vmatpush2.msra.mxu0 0.0
        %808 = vmatprep.subr.mxu0 0.0
        %809 = vmatpush2.msra.mxu0 0.0
        %810 = vmatprep.subr.mxu0 0.0
        %811 = vmatpush2.msra.mxu0 0.0
        %812 = vmatprep.subr.mxu0 0.0
        %813 = vmatpush2.msra.mxu0 0.0
        %814 = vmatprep.subr.mxu0 0.0
        %815 = vmatpush2.msra.mxu0 0.0
        %816 = vmatprep.subr.mxu0 0.0
        %817 = vmatpush2.msra.mxu0 0.0
        %818 = vmatprep.subr.mxu0 0.0
        %819 = vmatpush2.msra.mxu0 0.0
        %820 = vmatprep.subr.mxu0 0.0
        %821 = vmatpush2.msra.mxu0 0.0
        %822 = vmatprep.subr.mxu0 0.0
        %823 = vmatpush2.msra.mxu0 0.0
        %824 = vmatprep.subr.mxu0 0.0
        %825 = vmatpush2.msra.mxu0 0.0
        %826 = vmatprep.subr.mxu0 0.0
        %827 = vmatpush2.msra.mxu0 0.0
        %828 = vmatprep.subr.mxu0 0.0
        %829 = vmatpush2.msra.mxu0 0.0
        %830 = vmatprep.mubr.f32.mxu0 0.0
        %v831 = vand.u32 %v689, 4294901760
        %832 = vmatmul.mubr.f32.gmra.mxu0 %v831
        %v833 = vpop.f32.mrf.mxu0
        %v834 = vadd.f32 %v763, %v833
        %v835 = vpop.f32.mrf.mxu0
        %836 = vdwg.mxu0
        %837 = vmatprep.subr.mxu0 0.0
        %838 = vmatpush1.msra.mxu0 0.0
        %839 = vmatprep.subr.mxu0 0.0
        %840 = vmatpush1.msra.mxu0 0.0
        %841 = vmatprep.subr.mxu0 0.0
        %842 = vmatpush1.msra.mxu0 0.0
        %843 = vmatprep.subr.mxu0 0.0
        %844 = vmatpush1.msra.mxu0 0.0
        %845 = vmatprep.subr.mxu0 0.0
        %846 = vmatpush1.msra.mxu0 0.0
        %847 = vmatprep.subr.mxu0 0.0
        %848 = vmatpush1.msra.mxu0 0.0
        %849 = vmatprep.subr.mxu0 0.0
        %850 = vmatpush1.msra.mxu0 0.0
        %851 = vmatprep.subr.mxu0 0.0
        %852 = vmatpush1.msra.mxu0 0.0
        %853 = vmatprep.subr.mxu0 0.0
        %854 = vmatpush1.msra.mxu0 0.0
        %855 = vmatprep.subr.mxu0 0.0
        %856 = vmatpush1.msra.mxu0 0.0
        %857 = vmatprep.subr.mxu0 0.0
        %858 = vmatpush1.msra.mxu0 0.0
        %859 = vmatprep.subr.mxu0 0.0
        %860 = vmatpush1.msra.mxu0 0.0
        %861 = vmatprep.subr.mxu0 0.0
        %862 = vmatpush1.msra.mxu0 0.0
        %863 = vmatprep.subr.mxu0 0.0
        %864 = vmatpush1.msra.mxu0 0.0
        %865 = vmatprep.subr.mxu0 0.0
        %866 = vmatpush1.msra.mxu0 0.0
        %867 = vmatprep.subr.mxu0 0.0
        %868 = vmatpush1.msra.mxu0 0.0
        %869 = vmatprep.subr.mxu0 0.0
        %870 = vmatpush2.msra.mxu0 0.0
        %871 = vmatprep.subr.mxu0 0.0
        %872 = vmatpush2.msra.mxu0 0.0
        %873 = vmatprep.subr.mxu0 0.0
        %874 = vmatpush2.msra.mxu0 0.0
        %875 = vmatprep.subr.mxu0 0.0
        %876 = vmatpush2.msra.mxu0 0.0
        %877 = vmatprep.subr.mxu0 0.0
        %878 = vmatpush2.msra.mxu0 0.0
        %879 = vmatprep.subr.mxu0 0.0
        %880 = vmatpush2.msra.mxu0 0.0
        %881 = vmatprep.subr.mxu0 0.0
        %882 = vmatpush2.msra.mxu0 0.0
        %883 = vmatprep.subr.mxu0 0.0
        %884 = vmatpush2.msra.mxu0 0.0
        %885 = vmatprep.subr.mxu0 0.0
        %886 = vmatpush2.msra.mxu0 0.0
        %887 = vmatprep.subr.mxu0 0.0
        %888 = vmatpush2.msra.mxu0 0.0
        %889 = vmatprep.subr.mxu0 0.0
        %890 = vmatpush2.msra.mxu0 0.0
        %891 = vmatprep.subr.mxu0 0.0
        %892 = vmatpush2.msra.mxu0 0.0
        %893 = vmatprep.subr.mxu0 0.0
        %894 = vmatpush2.msra.mxu0 0.0
        %895 = vmatprep.subr.mxu0 0.0
        %896 = vmatpush2.msra.mxu0 0.0
        %897 = vmatprep.subr.mxu0 0.0
        %898 = vmatpush2.msra.mxu0 0.0
        %899 = vmatprep.subr.mxu0 0.0
        %900 = vmatpush2.msra.mxu0 0.0
        %901 = vmatprep.mubr.f32.mxu0 0.0
        %v902 = vand.u32 %v689, 4294901760
        %v903 = vsub.f32 %v689, %v902
        %904 = vmatmul.mubr.f32.gmra.mxu0 %v903
        %v905 = vpop.f32.mrf.mxu0
        %v906 = vadd.f32 %v834, %v905
        %v907 = vpop.f32.mrf.mxu0
        %908 = vdwg.mxu0
        %909 = vmatprep.subr.mxu0 0.0
        %910 = vmatpush1.msra.mxu0 0.0
        %911 = vmatprep.subr.mxu0 0.0
        %912 = vmatpush1.msra.mxu0 0.0
        %913 = vmatprep.subr.mxu0 0.0
        %914 = vmatpush1.msra.mxu0 0.0
        %915 = vmatprep.subr.mxu0 0.0
        %916 = vmatpush1.msra.mxu0 0.0
        %917 = vmatprep.subr.mxu0 0.0
        %918 = vmatpush1.msra.mxu0 0.0
        %919 = vmatprep.subr.mxu0 0.0
        %920 = vmatpush1.msra.mxu0 0.0
        %921 = vmatprep.subr.mxu0 0.0
        %922 = vmatpush1.msra.mxu0 0.0
        %923 = vmatprep.subr.mxu0 0.0
        %924 = vmatpush1.msra.mxu0 0.0
        %925 = vmatprep.subr.mxu0 0.0
        %926 = vmatpush1.msra.mxu0 0.0
        %927 = vmatprep.subr.mxu0 0.0
        %928 = vmatpush1.msra.mxu0 0.0
        %929 = vmatprep.subr.mxu0 0.0
        %930 = vmatpush1.msra.mxu0 0.0
        %931 = vmatprep.subr.mxu0 0.0
        %932 = vmatpush1.msra.mxu0 0.0
        %933 = vmatprep.subr.mxu0 0.0
        %934 = vmatpush1.msra.mxu0 1.0
        %935 = vmatprep.subr.mxu0 0.0
        %936 = vmatpush1.msra.mxu0 1.0
        %937 = vmatprep.subr.mxu0 0.0
        %938 = vmatpush1.msra.mxu0 1.0
        %939 = vmatprep.subr.mxu0 0.0
        %940 = vmatpush1.msra.mxu0 1.0
        %941 = vmatprep.subr.mxu0 0.0
        %942 = vmatpush2.msra.mxu0 0.0
        %943 = vmatprep.subr.mxu0 0.0
        %944 = vmatpush2.msra.mxu0 0.0
        %945 = vmatprep.subr.mxu0 0.0
        %946 = vmatpush2.msra.mxu0 0.0
        %947 = vmatprep.subr.mxu0 0.0
        %948 = vmatpush2.msra.mxu0 0.0
        %949 = vmatprep.subr.mxu0 0.0
        %950 = vmatpush2.msra.mxu0 0.0
        %951 = vmatprep.subr.mxu0 0.0
        %952 = vmatpush2.msra.mxu0 0.0
        %953 = vmatprep.subr.mxu0 0.0
        %954 = vmatpush2.msra.mxu0 0.0
        %955 = vmatprep.subr.mxu0 0.0
        %956 = vmatpush2.msra.mxu0 0.0
        %957 = vmatprep.subr.mxu0 0.0
        %958 = vmatpush2.msra.mxu0 0.0
        %959 = vmatprep.subr.mxu0 0.0
        %960 = vmatpush2.msra.mxu0 0.0
        %961 = vmatprep.subr.mxu0 0.0
        %962 = vmatpush2.msra.mxu0 0.0
        %963 = vmatprep.subr.mxu0 0.0
        %964 = vmatpush2.msra.mxu0 0.0
        %965 = vmatprep.subr.mxu0 0.0
        %966 = vmatpush2.msra.mxu0 0.0
        %967 = vmatprep.subr.mxu0 0.0
        %968 = vmatpush2.msra.mxu0 0.0
        %969 = vmatprep.subr.mxu0 0.0
        %970 = vmatpush2.msra.mxu0 0.0
        %971 = vmatprep.subr.mxu0 0.0
        %972 = vmatpush2.msra.mxu0 0.0
        %973 = vmatprep.mubr.f32.mxu0 0.0
        %v974 = vand.u32 %v689, 4294901760
        %v975 = vsub.f32 %v689, %v974
        %v976 = vand.u32 %v975, 4294901760
        %977 = vmatmul.mubr.f32.gmra.mxu0 %v976
        %v978 = vpop.f32.mrf.mxu0
        %v979 = vadd.f32 %v906, %v978
        %v980 = vpop.f32.mrf.mxu0
        %981 = vdwg.mxu0
        %982 = vmatprep.subr.mxu0 0.0
        %983 = vmatpush1.msra.mxu0 0.0
        %984 = vmatprep.subr.mxu0 0.0
        %985 = vmatpush1.msra.mxu0 0.0
        %986 = vmatprep.subr.mxu0 0.0
        %987 = vmatpush1.msra.mxu0 0.0
        %988 = vmatprep.subr.mxu0 0.0
        %989 = vmatpush1.msra.mxu0 0.0
        %990 = vmatprep.subr.mxu0 0.0
        %991 = vmatpush1.msra.mxu0 0.0
        %992 = vmatprep.subr.mxu0 0.0
        %993 = vmatpush1.msra.mxu0 0.0
        %994 = vmatprep.subr.mxu0 0.0
        %995 = vmatpush1.msra.mxu0 0.0
        %996 = vmatprep.subr.mxu0 0.0
        %997 = vmatpush1.msra.mxu0 0.0
        %998 = vmatprep.subr.mxu0 0.0
        %999 = vmatpush1.msra.mxu0 0.0
        %1000 = vmatprep.subr.mxu0 0.0
        %1001 = vmatpush1.msra.mxu0 0.0
        %1002 = vmatprep.subr.mxu0 0.0
        %1003 = vmatpush1.msra.mxu0 0.0
        %1004 = vmatprep.subr.mxu0 0.0
        %1005 = vmatpush1.msra.mxu0 0.0
        %1006 = vmatprep.subr.mxu0 0.0
        %1007 = vmatpush1.msra.mxu0 0.0
        %1008 = vmatprep.subr.mxu0 0.0
        %1009 = vmatpush1.msra.mxu0 0.0
        %1010 = vmatprep.subr.mxu0 0.0
        %1011 = vmatpush1.msra.mxu0 0.0
        %1012 = vmatprep.subr.mxu0 0.0
        %1013 = vmatpush1.msra.mxu0 0.0
        %1014 = vmatprep.subr.mxu0 0.0
        %1015 = vmatpush2.msra.mxu0 0.0
        %1016 = vmatprep.subr.mxu0 0.0
        %1017 = vmatpush2.msra.mxu0 0.0
        %1018 = vmatprep.subr.mxu0 0.0
        %1019 = vmatpush2.msra.mxu0 0.0
        %1020 = vmatprep.subr.mxu0 0.0
        %1021 = vmatpush2.msra.mxu0 0.0
        %1022 = vmatprep.subr.mxu0 0.0
        %1023 = vmatpush2.msra.mxu0 0.0
        %1024 = vmatprep.subr.mxu0 0.0
        %1025 = vmatpush2.msra.mxu0 0.0
        %1026 = vmatprep.subr.mxu0 0.0
        %1027 = vmatpush2.msra.mxu0 0.0
        %1028 = vmatprep.subr.mxu0 0.0
        %1029 = vmatpush2.msra.mxu0 0.0
        %1030 = vmatprep.subr.mxu0 0.0
        %1031 = vmatpush2.msra.mxu0 0.0
        %1032 = vmatprep.subr.mxu0 0.0
        %1033 = vmatpush2.msra.mxu0 0.0
        %1034 = vmatprep.subr.mxu0 0.0
        %1035 = vmatpush2.msra.mxu0 0.0
        %1036 = vmatprep.subr.mxu0 0.0
        %1037 = vmatpush2.msra.mxu0 0.0
        %1038 = vmatprep.subr.mxu0 0.0
        %1039 = vmatpush2.msra.mxu0 0.0
        %1040 = vmatprep.subr.mxu0 0.0
        %1041 = vmatpush2.msra.mxu0 0.0
        %1042 = vmatprep.subr.mxu0 0.0
        %1043 = vmatpush2.msra.mxu0 0.0
        %1044 = vmatprep.subr.mxu0 0.0
        %1045 = vmatpush2.msra.mxu0 0.0
        %1046 = vmatprep.mubr.f32.mxu0 0.0
        %v1047 = vand.u32 %v689, 4294901760
        %1048 = vmatmul.mubr.f32.gmra.mxu0 %v1047
        %v1049 = vpop.f32.mrf.mxu0
        %v1050 = vadd.f32 %v979, %v1049
        %v1051 = vpop.f32.mrf.mxu0
        %1052 = vdwg.mxu0
        %1053 = vmatprep.subr.mxu0 0.0
        %1054 = vmatpush1.msra.mxu0 0.0
        %1055 = vmatprep.subr.mxu0 0.0
        %1056 = vmatpush1.msra.mxu0 0.0
        %1057 = vmatprep.subr.mxu0 0.0
        %1058 = vmatpush1.msra.mxu0 0.0
        %1059 = vmatprep.subr.mxu0 0.0
        %1060 = vmatpush1.msra.mxu0 0.0
        %1061 = vmatprep.subr.mxu0 0.0
        %1062 = vmatpush1.msra.mxu0 0.0
        %1063 = vmatprep.subr.mxu0 0.0
        %1064 = vmatpush1.msra.mxu0 0.0
        %1065 = vmatprep.subr.mxu0 0.0
        %1066 = vmatpush1.msra.mxu0 0.0
        %1067 = vmatprep.subr.mxu0 0.0
        %1068 = vmatpush1.msra.mxu0 0.0
        %1069 = vmatprep.subr.mxu0 0.0
        %1070 = vmatpush1.msra.mxu0 0.0
        %1071 = vmatprep.subr.mxu0 0.0
        %1072 = vmatpush1.msra.mxu0 0.0
        %1073 = vmatprep.subr.mxu0 0.0
        %1074 = vmatpush1.msra.mxu0 0.0
        %1075 = vmatprep.subr.mxu0 0.0
        %1076 = vmatpush1.msra.mxu0 0.0
        %1077 = vmatprep.subr.mxu0 0.0
        %1078 = vmatpush1.msra.mxu0 1.0
        %1079 = vmatprep.subr.mxu0 0.0
        %1080 = vmatpush1.msra.mxu0 1.0
        %1081 = vmatprep.subr.mxu0 0.0
        %1082 = vmatpush1.msra.mxu0 1.0
        %1083 = vmatprep.subr.mxu0 0.0
        %1084 = vmatpush1.msra.mxu0 1.0
        %1085 = vmatprep.subr.mxu0 0.0
        %1086 = vmatpush2.msra.mxu0 0.0
        %1087 = vmatprep.subr.mxu0 0.0
        %1088 = vmatpush2.msra.mxu0 0.0
        %1089 = vmatprep.subr.mxu0 0.0
        %1090 = vmatpush2.msra.mxu0 0.0
        %1091 = vmatprep.subr.mxu0 0.0
        %1092 = vmatpush2.msra.mxu0 0.0
        %1093 = vmatprep.subr.mxu0 0.0
        %1094 = vmatpush2.msra.mxu0 0.0
        %1095 = vmatprep.subr.mxu0 0.0
        %1096 = vmatpush2.msra.mxu0 0.0
        %1097 = vmatprep.subr.mxu0 0.0
        %1098 = vmatpush2.msra.mxu0 0.0
        %1099 = vmatprep.subr.mxu0 0.0
        %1100 = vmatpush2.msra.mxu0 0.0
        %1101 = vmatprep.subr.mxu0 0.0
        %1102 = vmatpush2.msra.mxu0 0.0
        %1103 = vmatprep.subr.mxu0 0.0
        %1104 = vmatpush2.msra.mxu0 0.0
        %1105 = vmatprep.subr.mxu0 0.0
        %1106 = vmatpush2.msra.mxu0 0.0
        %1107 = vmatprep.subr.mxu0 0.0
        %1108 = vmatpush2.msra.mxu0 0.0
        %1109 = vmatprep.subr.mxu0 0.0
        %1110 = vmatpush2.msra.mxu0 0.0
        %1111 = vmatprep.subr.mxu0 0.0
        %1112 = vmatpush2.msra.mxu0 0.0
        %1113 = vmatprep.subr.mxu0 0.0
        %1114 = vmatpush2.msra.mxu0 0.0
        %1115 = vmatprep.subr.mxu0 0.0
        %1116 = vmatpush2.msra.mxu0 0.0
        %1117 = vmatprep.mubr.f32.mxu0 0.0
        %v1118 = vand.u32 %v689, 4294901760
        %1119 = vmatmul.mubr.f32.gmra.mxu0 %v1118
        %v1120 = vpop.f32.mrf.mxu0
        %v1121 = vadd.f32 %v1050, %v1120
        %v1122 = vpop.f32.mrf.mxu0
        %1123 = vdwg.mxu0
        %1125 = vrot.lane.b32.xlu0 %v237, 126
        %v1126 = vpop.permute.xlu0 %1125
        %v1127 = vsel %vm238, %v1126, 0
        %1129 = vmatprep.subr.mxu0 0.0
        %1130 = vmatpush1.msra.mxu0 0.0
        %1131 = vmatprep.subr.mxu0 0.0
        %1132 = vmatpush1.msra.mxu0 0.0
        %1133 = vmatprep.subr.mxu0 0.0
        %1134 = vmatpush1.msra.mxu0 0.0
        %1135 = vmatprep.subr.mxu0 0.0
        %1136 = vmatpush1.msra.mxu0 0.0
        %1137 = vmatprep.subr.mxu0 0.0
        %1138 = vmatpush1.msra.mxu0 0.0
        %1139 = vmatprep.subr.mxu0 0.0
        %1140 = vmatpush1.msra.mxu0 0.0
        %1141 = vmatprep.subr.mxu0 0.0
        %1142 = vmatpush1.msra.mxu0 0.0
        %1143 = vmatprep.subr.mxu0 0.0
        %1144 = vmatpush1.msra.mxu0 0.0
        %1145 = vmatprep.subr.mxu0 0.0
        %1146 = vmatpush1.msra.mxu0 0.0
        %1147 = vmatprep.subr.mxu0 0.0
        %1148 = vmatpush1.msra.mxu0 0.0
        %1149 = vmatprep.subr.mxu0 0.0
        %1150 = vmatpush1.msra.mxu0 0.0
        %1151 = vmatprep.subr.mxu0 0.0
        %1152 = vmatpush1.msra.mxu0 0.0
        %1153 = vmatprep.subr.mxu0 0.0
        %1154 = vmatpush1.msra.mxu0 1.0
        %1155 = vmatprep.subr.mxu0 0.0
        %1156 = vmatpush1.msra.mxu0 1.0
        %1157 = vmatprep.subr.mxu0 0.0
        %1158 = vmatpush1.msra.mxu0 1.0
        %1159 = vmatprep.subr.mxu0 0.0
        %1160 = vmatpush1.msra.mxu0 1.0
        %1161 = vmatprep.subr.mxu0 0.0
        %1162 = vmatpush2.msra.mxu0 0.0
        %1163 = vmatprep.subr.mxu0 0.0
        %1164 = vmatpush2.msra.mxu0 0.0
        %1165 = vmatprep.subr.mxu0 0.0
        %1166 = vmatpush2.msra.mxu0 0.0
        %1167 = vmatprep.subr.mxu0 0.0
        %1168 = vmatpush2.msra.mxu0 0.0
        %1169 = vmatprep.subr.mxu0 0.0
        %1170 = vmatpush2.msra.mxu0 0.0
        %1171 = vmatprep.subr.mxu0 0.0
        %1172 = vmatpush2.msra.mxu0 0.0
        %1173 = vmatprep.subr.mxu0 0.0
        %1174 = vmatpush2.msra.mxu0 0.0
        %1175 = vmatprep.subr.mxu0 0.0
        %1176 = vmatpush2.msra.mxu0 0.0
        %1177 = vmatprep.subr.mxu0 0.0
        %1178 = vmatpush2.msra.mxu0 0.0
        %1179 = vmatprep.subr.mxu0 0.0
        %1180 = vmatpush2.msra.mxu0 0.0
        %1181 = vmatprep.subr.mxu0 0.0
        %1182 = vmatpush2.msra.mxu0 0.0
        %1183 = vmatprep.subr.mxu0 0.0
        %1184 = vmatpush2.msra.mxu0 0.0
        %1185 = vmatprep.subr.mxu0 0.0
        %1186 = vmatpush2.msra.mxu0 0.0
        %1187 = vmatprep.subr.mxu0 0.0
        %1188 = vmatpush2.msra.mxu0 0.0
        %1189 = vmatprep.subr.mxu0 0.0
        %1190 = vmatpush2.msra.mxu0 0.0
        %1191 = vmatprep.subr.mxu0 0.0
        %1192 = vmatpush2.msra.mxu0 0.0
        %1193 = vmatprep.mubr.f32.mxu0 0.0
        %v1194 = vand.u32 %v1127, 4294901760
        %v1195 = vsub.f32 %v1127, %v1194
        %v1196 = vand.u32 %v1195, 4294901760
        %v1197 = vsub.f32 %v1195, %v1196
        %v1198 = vand.u32 %v1197, 4294901760
        %1199 = vmatmul.mubr.f32.gmra.mxu0 %v1198
        %v1200 = vpop.f32.mrf.mxu0
        %v1201 = vadd.f32 0.0, %v1200
        %v1202 = vpop.f32.mrf.mxu0
        %1203 = vdwg.mxu0
        %1204 = vmatprep.subr.mxu0 0.0
        %1205 = vmatpush1.msra.mxu0 0.0
        %1206 = vmatprep.subr.mxu0 0.0
        %1207 = vmatpush1.msra.mxu0 0.0
        %1208 = vmatprep.subr.mxu0 0.0
        %1209 = vmatpush1.msra.mxu0 0.0
        %1210 = vmatprep.subr.mxu0 0.0
        %1211 = vmatpush1.msra.mxu0 0.0
        %1212 = vmatprep.subr.mxu0 0.0
        %1213 = vmatpush1.msra.mxu0 0.0
        %1214 = vmatprep.subr.mxu0 0.0
        %1215 = vmatpush1.msra.mxu0 0.0
        %1216 = vmatprep.subr.mxu0 0.0
        %1217 = vmatpush1.msra.mxu0 0.0
        %1218 = vmatprep.subr.mxu0 0.0
        %1219 = vmatpush1.msra.mxu0 0.0
        %1220 = vmatprep.subr.mxu0 0.0
        %1221 = vmatpush1.msra.mxu0 0.0
        %1222 = vmatprep.subr.mxu0 0.0
        %1223 = vmatpush1.msra.mxu0 0.0
        %1224 = vmatprep.subr.mxu0 0.0
        %1225 = vmatpush1.msra.mxu0 0.0
        %1226 = vmatprep.subr.mxu0 0.0
        %1227 = vmatpush1.msra.mxu0 0.0
        %1228 = vmatprep.subr.mxu0 0.0
        %1229 = vmatpush1.msra.mxu0 0.0
        %1230 = vmatprep.subr.mxu0 0.0
        %1231 = vmatpush1.msra.mxu0 0.0
        %1232 = vmatprep.subr.mxu0 0.0
        %1233 = vmatpush1.msra.mxu0 0.0
        %1234 = vmatprep.subr.mxu0 0.0
        %1235 = vmatpush1.msra.mxu0 0.0
        %1236 = vmatprep.subr.mxu0 0.0
        %1237 = vmatpush2.msra.mxu0 0.0
        %1238 = vmatprep.subr.mxu0 0.0
        %1239 = vmatpush2.msra.mxu0 0.0
        %1240 = vmatprep.subr.mxu0 0.0
        %1241 = vmatpush2.msra.mxu0 0.0
        %1242 = vmatprep.subr.mxu0 0.0
        %1243 = vmatpush2.msra.mxu0 0.0
        %1244 = vmatprep.subr.mxu0 0.0
        %1245 = vmatpush2.msra.mxu0 0.0
        %1246 = vmatprep.subr.mxu0 0.0
        %1247 = vmatpush2.msra.mxu0 0.0
        %1248 = vmatprep.subr.mxu0 0.0
        %1249 = vmatpush2.msra.mxu0 0.0
        %1250 = vmatprep.subr.mxu0 0.0
        %1251 = vmatpush2.msra.mxu0 0.0
        %1252 = vmatprep.subr.mxu0 0.0
        %1253 = vmatpush2.msra.mxu0 0.0
        %1254 = vmatprep.subr.mxu0 0.0
        %1255 = vmatpush2.msra.mxu0 0.0
        %1256 = vmatprep.subr.mxu0 0.0
        %1257 = vmatpush2.msra.mxu0 0.0
        %1258 = vmatprep.subr.mxu0 0.0
        %1259 = vmatpush2.msra.mxu0 0.0
        %1260 = vmatprep.subr.mxu0 0.0
        %1261 = vmatpush2.msra.mxu0 0.0
        %1262 = vmatprep.subr.mxu0 0.0
        %1263 = vmatpush2.msra.mxu0 0.0
        %1264 = vmatprep.subr.mxu0 0.0
        %1265 = vmatpush2.msra.mxu0 0.0
        %1266 = vmatprep.subr.mxu0 0.0
        %1267 = vmatpush2.msra.mxu0 0.0
        %1268 = vmatprep.mubr.f32.mxu0 0.0
        %v1269 = vand.u32 %v1127, 4294901760
        %1270 = vmatmul.mubr.f32.gmra.mxu0 %v1269
        %v1271 = vpop.f32.mrf.mxu0
        %v1272 = vadd.f32 %v1201, %v1271
        %v1273 = vpop.f32.mrf.mxu0
        %1274 = vdwg.mxu0
        %1275 = vmatprep.subr.mxu0 0.0
        %1276 = vmatpush1.msra.mxu0 0.0
        %1277 = vmatprep.subr.mxu0 0.0
        %1278 = vmatpush1.msra.mxu0 0.0
        %1279 = vmatprep.subr.mxu0 0.0
        %1280 = vmatpush1.msra.mxu0 0.0
        %1281 = vmatprep.subr.mxu0 0.0
        %1282 = vmatpush1.msra.mxu0 0.0
        %1283 = vmatprep.subr.mxu0 0.0
        %1284 = vmatpush1.msra.mxu0 0.0
        %1285 = vmatprep.subr.mxu0 0.0
        %1286 = vmatpush1.msra.mxu0 0.0
        %1287 = vmatprep.subr.mxu0 0.0
        %1288 = vmatpush1.msra.mxu0 0.0
        %1289 = vmatprep.subr.mxu0 0.0
        %1290 = vmatpush1.msra.mxu0 0.0
        %1291 = vmatprep.subr.mxu0 0.0
        %1292 = vmatpush1.msra.mxu0 0.0
        %1293 = vmatprep.subr.mxu0 0.0
        %1294 = vmatpush1.msra.mxu0 0.0
        %1295 = vmatprep.subr.mxu0 0.0
        %1296 = vmatpush1.msra.mxu0 0.0
        %1297 = vmatprep.subr.mxu0 0.0
        %1298 = vmatpush1.msra.mxu0 0.0
        %1299 = vmatprep.subr.mxu0 0.0
        %1300 = vmatpush1.msra.mxu0 0.0
        %1301 = vmatprep.subr.mxu0 0.0
        %1302 = vmatpush1.msra.mxu0 0.0
        %1303 = vmatprep.subr.mxu0 0.0
        %1304 = vmatpush1.msra.mxu0 0.0
        %1305 = vmatprep.subr.mxu0 0.0
        %1306 = vmatpush1.msra.mxu0 0.0
        %1307 = vmatprep.subr.mxu0 0.0
        %1308 = vmatpush2.msra.mxu0 0.0
        %1309 = vmatprep.subr.mxu0 0.0
        %1310 = vmatpush2.msra.mxu0 0.0
        %1311 = vmatprep.subr.mxu0 0.0
        %1312 = vmatpush2.msra.mxu0 0.0
        %1313 = vmatprep.subr.mxu0 0.0
        %1314 = vmatpush2.msra.mxu0 0.0
        %1315 = vmatprep.subr.mxu0 0.0
        %1316 = vmatpush2.msra.mxu0 0.0
        %1317 = vmatprep.subr.mxu0 0.0
        %1318 = vmatpush2.msra.mxu0 0.0
        %1319 = vmatprep.subr.mxu0 0.0
        %1320 = vmatpush2.msra.mxu0 0.0
        %1321 = vmatprep.subr.mxu0 0.0
        %1322 = vmatpush2.msra.mxu0 0.0
        %1323 = vmatprep.subr.mxu0 0.0
        %1324 = vmatpush2.msra.mxu0 0.0
        %1325 = vmatprep.subr.mxu0 0.0
        %1326 = vmatpush2.msra.mxu0 0.0
        %1327 = vmatprep.subr.mxu0 0.0
        %1328 = vmatpush2.msra.mxu0 0.0
        %1329 = vmatprep.subr.mxu0 0.0
        %1330 = vmatpush2.msra.mxu0 0.0
        %1331 = vmatprep.subr.mxu0 0.0
        %1332 = vmatpush2.msra.mxu0 0.0
        %1333 = vmatprep.subr.mxu0 0.0
        %1334 = vmatpush2.msra.mxu0 0.0
        %1335 = vmatprep.subr.mxu0 0.0
        %1336 = vmatpush2.msra.mxu0 0.0
        %1337 = vmatprep.subr.mxu0 0.0
        %1338 = vmatpush2.msra.mxu0 0.0
        %1339 = vmatprep.mubr.f32.mxu0 0.0
        %v1340 = vand.u32 %v1127, 4294901760
        %v1341 = vsub.f32 %v1127, %v1340
        %1342 = vmatmul.mubr.f32.gmra.mxu0 %v1341
        %v1343 = vpop.f32.mrf.mxu0
        %v1344 = vadd.f32 %v1272, %v1343
        %v1345 = vpop.f32.mrf.mxu0
        %1346 = vdwg.mxu0
        %1347 = vmatprep.subr.mxu0 0.0
        %1348 = vmatpush1.msra.mxu0 0.0
        %1349 = vmatprep.subr.mxu0 0.0
        %1350 = vmatpush1.msra.mxu0 0.0
        %1351 = vmatprep.subr.mxu0 0.0
        %1352 = vmatpush1.msra.mxu0 0.0
        %1353 = vmatprep.subr.mxu0 0.0
        %1354 = vmatpush1.msra.mxu0 0.0
        %1355 = vmatprep.subr.mxu0 0.0
        %1356 = vmatpush1.msra.mxu0 0.0
        %1357 = vmatprep.subr.mxu0 0.0
        %1358 = vmatpush1.msra.mxu0 0.0
        %1359 = vmatprep.subr.mxu0 0.0
        %1360 = vmatpush1.msra.mxu0 0.0
        %1361 = vmatprep.subr.mxu0 0.0
        %1362 = vmatpush1.msra.mxu0 0.0
        %1363 = vmatprep.subr.mxu0 0.0
        %1364 = vmatpush1.msra.mxu0 0.0
        %1365 = vmatprep.subr.mxu0 0.0
        %1366 = vmatpush1.msra.mxu0 0.0
        %1367 = vmatprep.subr.mxu0 0.0
        %1368 = vmatpush1.msra.mxu0 0.0
        %1369 = vmatprep.subr.mxu0 0.0
        %1370 = vmatpush1.msra.mxu0 0.0
        %1371 = vmatprep.subr.mxu0 0.0
        %1372 = vmatpush1.msra.mxu0 1.0
        %1373 = vmatprep.subr.mxu0 0.0
        %1374 = vmatpush1.msra.mxu0 1.0
        %1375 = vmatprep.subr.mxu0 0.0
        %1376 = vmatpush1.msra.mxu0 1.0
        %1377 = vmatprep.subr.mxu0 0.0
        %1378 = vmatpush1.msra.mxu0 1.0
        %1379 = vmatprep.subr.mxu0 0.0
        %1380 = vmatpush2.msra.mxu0 0.0
        %1381 = vmatprep.subr.mxu0 0.0
        %1382 = vmatpush2.msra.mxu0 0.0
        %1383 = vmatprep.subr.mxu0 0.0
        %1384 = vmatpush2.msra.mxu0 0.0
        %1385 = vmatprep.subr.mxu0 0.0
        %1386 = vmatpush2.msra.mxu0 0.0
        %1387 = vmatprep.subr.mxu0 0.0
        %1388 = vmatpush2.msra.mxu0 0.0
        %1389 = vmatprep.subr.mxu0 0.0
        %1390 = vmatpush2.msra.mxu0 0.0
        %1391 = vmatprep.subr.mxu0 0.0
        %1392 = vmatpush2.msra.mxu0 0.0
        %1393 = vmatprep.subr.mxu0 0.0
        %1394 = vmatpush2.msra.mxu0 0.0
        %1395 = vmatprep.subr.mxu0 0.0
        %1396 = vmatpush2.msra.mxu0 0.0
        %1397 = vmatprep.subr.mxu0 0.0
        %1398 = vmatpush2.msra.mxu0 0.0
        %1399 = vmatprep.subr.mxu0 0.0
        %1400 = vmatpush2.msra.mxu0 0.0
        %1401 = vmatprep.subr.mxu0 0.0
        %1402 = vmatpush2.msra.mxu0 0.0
        %1403 = vmatprep.subr.mxu0 0.0
        %1404 = vmatpush2.msra.mxu0 0.0
        %1405 = vmatprep.subr.mxu0 0.0
        %1406 = vmatpush2.msra.mxu0 0.0
        %1407 = vmatprep.subr.mxu0 0.0
        %1408 = vmatpush2.msra.mxu0 0.0
        %1409 = vmatprep.subr.mxu0 0.0
        %1410 = vmatpush2.msra.mxu0 0.0
        %1411 = vmatprep.mubr.f32.mxu0 0.0
        %v1412 = vand.u32 %v1127, 4294901760
        %v1413 = vsub.f32 %v1127, %v1412
        %v1414 = vand.u32 %v1413, 4294901760
        %1415 = vmatmul.mubr.f32.gmra.mxu0 %v1414
        %v1416 = vpop.f32.mrf.mxu0
        %v1417 = vadd.f32 %v1344, %v1416
        %v1418 = vpop.f32.mrf.mxu0
        %1419 = vdwg.mxu0
        %1420 = vmatprep.subr.mxu0 0.0
        %1421 = vmatpush1.msra.mxu0 0.0
        %1422 = vmatprep.subr.mxu0 0.0
        %1423 = vmatpush1.msra.mxu0 0.0
        %1424 = vmatprep.subr.mxu0 0.0
        %1425 = vmatpush1.msra.mxu0 0.0
        %1426 = vmatprep.subr.mxu0 0.0
        %1427 = vmatpush1.msra.mxu0 0.0
        %1428 = vmatprep.subr.mxu0 0.0
        %1429 = vmatpush1.msra.mxu0 0.0
        %1430 = vmatprep.subr.mxu0 0.0
        %1431 = vmatpush1.msra.mxu0 0.0
        %1432 = vmatprep.subr.mxu0 0.0
        %1433 = vmatpush1.msra.mxu0 0.0
        %1434 = vmatprep.subr.mxu0 0.0
        %1435 = vmatpush1.msra.mxu0 0.0
        %1436 = vmatprep.subr.mxu0 0.0
        %1437 = vmatpush1.msra.mxu0 0.0
        %1438 = vmatprep.subr.mxu0 0.0
        %1439 = vmatpush1.msra.mxu0 0.0
        %1440 = vmatprep.subr.mxu0 0.0
        %1441 = vmatpush1.msra.mxu0 0.0
        %1442 = vmatprep.subr.mxu0 0.0
        %1443 = vmatpush1.msra.mxu0 0.0
        %1444 = vmatprep.subr.mxu0 0.0
        %1445 = vmatpush1.msra.mxu0 0.0
        %1446 = vmatprep.subr.mxu0 0.0
        %1447 = vmatpush1.msra.mxu0 0.0
        %1448 = vmatprep.subr.mxu0 0.0
        %1449 = vmatpush1.msra.mxu0 0.0
        %1450 = vmatprep.subr.mxu0 0.0
        %1451 = vmatpush1.msra.mxu0 0.0
        %1452 = vmatprep.subr.mxu0 0.0
        %1453 = vmatpush2.msra.mxu0 0.0
        %1454 = vmatprep.subr.mxu0 0.0
        %1455 = vmatpush2.msra.mxu0 0.0
        %1456 = vmatprep.subr.mxu0 0.0
        %1457 = vmatpush2.msra.mxu0 0.0
        %1458 = vmatprep.subr.mxu0 0.0
        %1459 = vmatpush2.msra.mxu0 0.0
        %1460 = vmatprep.subr.mxu0 0.0
        %1461 = vmatpush2.msra.mxu0 0.0
        %1462 = vmatprep.subr.mxu0 0.0
        %1463 = vmatpush2.msra.mxu0 0.0
        %1464 = vmatprep.subr.mxu0 0.0
        %1465 = vmatpush2.msra.mxu0 0.0
        %1466 = vmatprep.subr.mxu0 0.0
        %1467 = vmatpush2.msra.mxu0 0.0
        %1468 = vmatprep.subr.mxu0 0.0
        %1469 = vmatpush2.msra.mxu0 0.0
        %1470 = vmatprep.subr.mxu0 0.0
        %1471 = vmatpush2.msra.mxu0 0.0
        %1472 = vmatprep.subr.mxu0 0.0
        %1473 = vmatpush2.msra.mxu0 0.0
        %1474 = vmatprep.subr.mxu0 0.0
        %1475 = vmatpush2.msra.mxu0 0.0
        %1476 = vmatprep.subr.mxu0 0.0
        %1477 = vmatpush2.msra.mxu0 0.0
        %1478 = vmatprep.subr.mxu0 0.0
        %1479 = vmatpush2.msra.mxu0 0.0
        %1480 = vmatprep.subr.mxu0 0.0
        %1481 = vmatpush2.msra.mxu0 0.0
        %1482 = vmatprep.subr.mxu0 0.0
        %1483 = vmatpush2.msra.mxu0 0.0
        %1484 = vmatprep.mubr.f32.mxu0 0.0
        %v1485 = vand.u32 %v1127, 4294901760
        %1486 = vmatmul.mubr.f32.gmra.mxu0 %v1485
        %v1487 = vpop.f32.mrf.mxu0
        %v1488 = vadd.f32 %v1417, %v1487
        %v1489 = vpop.f32.mrf.mxu0
        %1490 = vdwg.mxu0
        %1491 = vmatprep.subr.mxu0 0.0
        %1492 = vmatpush1.msra.mxu0 0.0
        %1493 = vmatprep.subr.mxu0 0.0
        %1494 = vmatpush1.msra.mxu0 0.0
        %1495 = vmatprep.subr.mxu0 0.0
        %1496 = vmatpush1.msra.mxu0 0.0
        %1497 = vmatprep.subr.mxu0 0.0
        %1498 = vmatpush1.msra.mxu0 0.0
        %1499 = vmatprep.subr.mxu0 0.0
        %1500 = vmatpush1.msra.mxu0 0.0
        %1501 = vmatprep.subr.mxu0 0.0
        %1502 = vmatpush1.msra.mxu0 0.0
        %1503 = vmatprep.subr.mxu0 0.0
        %1504 = vmatpush1.msra.mxu0 0.0
        %1505 = vmatprep.subr.mxu0 0.0
        %1506 = vmatpush1.msra.mxu0 0.0
        %1507 = vmatprep.subr.mxu0 0.0
        %1508 = vmatpush1.msra.mxu0 0.0
        %1509 = vmatprep.subr.mxu0 0.0
        %1510 = vmatpush1.msra.mxu0 0.0
        %1511 = vmatprep.subr.mxu0 0.0
        %1512 = vmatpush1.msra.mxu0 0.0
        %1513 = vmatprep.subr.mxu0 0.0
        %1514 = vmatpush1.msra.mxu0 0.0
        %1515 = vmatprep.subr.mxu0 0.0
        %1516 = vmatpush1.msra.mxu0 1.0
        %1517 = vmatprep.subr.mxu0 0.0
        %1518 = vmatpush1.msra.mxu0 1.0
        %1519 = vmatprep.subr.mxu0 0.0
        %1520 = vmatpush1.msra.mxu0 1.0
        %1521 = vmatprep.subr.mxu0 0.0
        %1522 = vmatpush1.msra.mxu0 1.0
        %1523 = vmatprep.subr.mxu0 0.0
        %1524 = vmatpush2.msra.mxu0 0.0
        %1525 = vmatprep.subr.mxu0 0.0
        %1526 = vmatpush2.msra.mxu0 0.0
        %1527 = vmatprep.subr.mxu0 0.0
        %1528 = vmatpush2.msra.mxu0 0.0
        %1529 = vmatprep.subr.mxu0 0.0
        %1530 = vmatpush2.msra.mxu0 0.0
        %1531 = vmatprep.subr.mxu0 0.0
        %1532 = vmatpush2.msra.mxu0 0.0
        %1533 = vmatprep.subr.mxu0 0.0
        %1534 = vmatpush2.msra.mxu0 0.0
        %1535 = vmatprep.subr.mxu0 0.0
        %1536 = vmatpush2.msra.mxu0 0.0
        %1537 = vmatprep.subr.mxu0 0.0
        %1538 = vmatpush2.msra.mxu0 0.0
        %1539 = vmatprep.subr.mxu0 0.0
        %1540 = vmatpush2.msra.mxu0 0.0
        %1541 = vmatprep.subr.mxu0 0.0
        %1542 = vmatpush2.msra.mxu0 0.0
        %1543 = vmatprep.subr.mxu0 0.0
        %1544 = vmatpush2.msra.mxu0 0.0
        %1545 = vmatprep.subr.mxu0 0.0
        %1546 = vmatpush2.msra.mxu0 0.0
        %1547 = vmatprep.subr.mxu0 0.0
        %1548 = vmatpush2.msra.mxu0 0.0
        %1549 = vmatprep.subr.mxu0 0.0
        %1550 = vmatpush2.msra.mxu0 0.0
        %1551 = vmatprep.subr.mxu0 0.0
        %1552 = vmatpush2.msra.mxu0 0.0
        %1553 = vmatprep.subr.mxu0 0.0
        %1554 = vmatpush2.msra.mxu0 0.0
        %1555 = vmatprep.mubr.f32.mxu0 0.0
        %v1556 = vand.u32 %v1127, 4294901760
        %1557 = vmatmul.mubr.f32.gmra.mxu0 %v1556
        %v1558 = vpop.f32.mrf.mxu0
        %v1559 = vadd.f32 %v1488, %v1558
        %v1560 = vpop.f32.mrf.mxu0
        %1561 = vdwg.mxu0
        %v1562 = vlog2.pop %v678
        %v1563 = vmul.f32 %v1562, 0.6931472
        %v1564 = vrcp.pop %v1559
        %v1565 = vmul.f32 %v1121, %v1564
        %v1566 = vsub.f32 %v1563, %v1565
        %s1567 = sadd.s32 %s23, %s24
        %s1568 = smul.u32 %s1567, 8
        %v1569 = vlaneseq
        %v1570 = vshrl.u32 %v1569, 7
        %v1571 = vstv %s1568
        %v1572 = vadd.s32 %v1571, %v1570
        %vm1573 = vcmp.lt.s32.totalorder %v1572, 8
        %v1574 = vsel %vm1573, %v1566, 0.0
        %v1575 = vld [vmem:[#allocation2] sm:$0x1]
        %vm1576 = vcmask 7168
        %v1577 = vsel %vm1576, %v1574, 0.0
        %1578 = vadd.xlane.f32.xlu0 %v1577
        %v1579 = vpop.xlane.xlu0 %1578
        %v1580 = vrot.slane %v1579, 4
        %v1581 = vadd.f32 %v1579, %v1580
        %v1582 = vrot.slane %v1581, 2
        %v1583 = vadd.f32 %v1581, %v1582
        %v1584 = vrot.slane %v1583, 1
        %v1585 = vadd.f32 %v1583, %v1584
        %s1586 = vtos %v1585
        %v1587 = vstv %s1586
        %v1588 = vadd.f32 %v1575, %v1587
        %vm1589 = vcmask 0
        %1590 = vst.msk [vmem:[#allocation2] sm:$0x1] %vm1589, %v1588
        // Predicated region
        $region41: #{tpu_custom_call.1} parent=27 // pred_check
          %p1591 = pneg %p230
        $region42: #{tpu_custom_call.1} parent=27 // pred_check_branch
          %1593 = sbr.rel (%p1591) target = $region44
        $region43: #{tpu_custom_call.1} parent=27 // pred_region
          %v1594 = vld [vmem:[#allocation2] sm:$0x1]
          %1595 = vst.msk [vmem:[%s229] sm:$0x1] %vm1589, %v1594
        $region44: #{tpu_custom_call.1} parent=27 // pred_fallthru
          _
        %p1596 = scmp.lt.s32.totalorder %s23, 1
        %s1597 = scalar_select %p1596, %s23, 1
        %s1598 = scalar_lea.vmem %s2, %s1597
        // Predicated region
        $region45: #{tpu_custom_call.1} parent=27 // pred_check
          %p1599 = pneg %p113
        $region46: #{tpu_custom_call.1} parent=27 // pred_check_branch
          %1601 = sbr.rel (%p1599) target = $region48
        $region47: #{tpu_custom_call.1} parent=27 // pred_region
          _
        $region48: #{tpu_custom_call.1} parent=27 // pred_fallthru
          _
      $region28: #{tpu_custom_call.1} parent=5 // pred_fallthru
        _
      %p1602 = scmp.le.s32.totalorder 2, %s14
      // Predicated region
      $region49: #{tpu_custom_call.1} parent=5 // pred_check
        %p1603 = pneg %p1602
      $region50: #{tpu_custom_call.1} parent=5 // pred_check_branch
        %1605 = sbr.rel (%p1603) target = $region52
      $region51: #{tpu_custom_call.1} parent=5 // pred_region
        %s1606 = ssub.s32 %s14, 2
        // Predicated region
        $region53: #{tpu_custom_call.1} parent=51 // pred_check
          %p1607 = pneg %p119
        $region54: #{tpu_custom_call.1} parent=51 // pred_check_branch
          %1609 = sbr.rel (%p1607) target = $region56
        $region55: #{tpu_custom_call.1} parent=51 // pred_region
          %p1610 = scmp.lt.s32.totalorder %s25, 1
          %s1611 = scalar_select %p1610, %s25, 1
          %s1612 = scalar_lea.vmem %s2, %s1611
        $region56: #{tpu_custom_call.1} parent=51 // pred_fallthru
          _
      $region52: #{tpu_custom_call.1} parent=5 // pred_fallthru
        _
    $region6: #{tpu_custom_call.1} parent=1 // loop_footer
      %s18 = sadd.s32 1, %s14
    $region7: #{tpu_custom_call.1} parent=1 // loop_footer_branch
      %13 = sbr.rel target = $region3
    $region8: #{tpu_custom_call.1} parent=1 // loop_exit
      _
    %1613 = vsyncpa [#allocation4], 1
    %s1614 = scalar_lea.sflag [#allocation4], 1
    %1615 = vsyncpa %s1614, 1
    %1616 = vsyncpa [#allocation6], 1
    %s1617 = scalar_lea.sflag [#allocation6], 1
    %1618 = vsyncpa %s1617, 1

</llo_original>
